<compile_context>
chip_gen: v5e
topology: v5e:2x2
jax: 0.10.0
libtpu: 0.0.40
codegen_flags: <defaults>
</compile_context>

<pallas_src>
import jax
import jax.numpy as jnp
from jax import lax
from jax.experimental import pallas as pl
from jax.experimental.pallas import tpu as pltpu


# ---------------------------------------------------------------------------
# helpers
# ---------------------------------------------------------------------------

def _round_up(v, m):
    return ((v + m - 1) // m) * m


def _pick_tile(hw):
    """Pick the HW tile width (lanes)."""
    # Prefer >=512-lane tiles (HBM-roofline sweet spot) while keeping >=2
    # tiles so the two-phase accumulation path is exercised; fall back to a
    # single full-HW block if HW is not 128-divisible.
    for tk in (512, 256, 128):
        if hw % tk == 0 and hw // tk >= 2:
            return tk
    for tk in (512, 256, 128):
        if hw % tk == 0:
            return tk
    return hw


def _vmem_limit_bytes():
    # Raise scoped VMEM above the conservative defaults (16/32 MiB) but keep
    # headroom for DMA double-buffers: ~96 MiB on v5e/v6e, ~48 MiB on v7x.
    try:
        cap = pltpu.get_tpu_info().vmem_capacity_bytes
        return int(min(cap * 3 // 4, 100 * 1024 * 1024))
    except Exception:
        return 64 * 1024 * 1024


# ---------------------------------------------------------------------------
# Fused Pallas kernel: CAM + upsample + graph branch + final 1x1 conv
# Grid: (N, phase in {0,1}, HW // TK)
# ---------------------------------------------------------------------------

def dual_fused_kernel(x_ref, loc_ref, rT_ref, gamma_ref,
                      wphi_ref, bphi_ref, wth_ref, bth_ref,
                      wadj_ref, badj_ref, wwg_ref, bwg_ref,
                      w3_ref, b3_ref, wf1_ref, wf2_ref, bf_ref,
                      o_ref,
                      zacc_ref, bscr_ref, zw_ref, la_ref):
    """Per-(batch, phase, HW-tile) fused forward.

    x_ref   : (1, C, TK)   bf16  flattened input feature tile
    loc_ref : (1, C, L2p)  f32   local branch output (L2 zero-padded to 128k)
    rT_ref  : (L2p, TK)    bf16  kron(Rh, Rw)^T bilinear interpolation tile
    gamma   : (1,)         f32   CAM gamma (SMEM scalar, runtime parameter)
    w*/b*   : folded 1x1-conv + BN weights (matmul weights bf16, biases f32)
    o_ref   : (1, C, TK)   bf16  output tile (written in phase 1 only)
    scratch : z_idt f32 accumulator, staged-b bf16, zw bf16, loc_att bf16
    """
    phase = pl.program_id(1)
    t = pl.program_id(2)
    x_bf = x_ref[0]                                          # (C, TK) bf16

    # ---------------- phase 0: stream HW tiles, stage b, accumulate z_idt ----
    @pl.when(phase == 0)
    def _phase0():
        @pl.when(t == 0)
        def _init():
            zacc_ref[...] = jnp.zeros_like(zacc_ref)

        xs = jnp.dot(wphi_ref[...], x_bf,
                     preferred_element_type=jnp.float32) + bphi_ref[...]
        b = jnp.dot(wth_ref[...], x_bf,
                    preferred_element_type=jnp.float32) + bth_ref[...]
        b_bf = b.astype(jnp.bfloat16)
        bscr_ref[t] = b_bf                                   # stage for phase 1
        # z_idt += xs @ b^T   (lane contraction on both operands)
        # TODO(synk): check via pl.lower_as_mlir that no XLU transpose of b_bf
        # is emitted here; if so, restructure the operand layouts.
        zacc_ref[...] += jnp.einsum("ck,dk->cd", xs.astype(jnp.bfloat16), b_bf,
                                    preferred_element_type=jnp.float32)

    # ---------------- phase 1: tiny CAM/adj/wwg once, then per-tile epilogue -
    @pl.when(phase == 1)
    def _phase1():
        @pl.when(t == 0)
        def _prep():
            # CAM channel attention on the small local feature (C, L2p);
            # zero-padded L2 columns are a numerical no-op.
            loc = loc_ref[0]                                          # f32
            energy = jnp.einsum("ck,dk->cd", loc, loc,
                                preferred_element_type=jnp.float32)   # (C, C)
            en = jnp.max(energy, axis=-1, keepdims=True) - energy
            e = jnp.exp(en - jnp.max(en, axis=-1, keepdims=True))
            att = e * pl.reciprocal(jnp.sum(e, axis=-1, keepdims=True),
                                    approx=True)
            cam = jnp.dot(att, loc, preferred_element_type=jnp.float32)
            la_ref[...] = (gamma_ref[0] * cam + loc).astype(jnp.bfloat16)

            # adj / wwg on the accumulated z_idt (tiny (C2, C4) matrices).
            z_idt = zacc_ref[...]
            z = (z_idt
                 + jnp.einsum("cd,ed->ce", z_idt.astype(jnp.bfloat16),
                              wadj_ref[...],
                              preferred_element_type=jnp.float32)
                 + badj_ref[...])
            zw = jnp.dot(wwg_ref[...], z.astype(jnp.bfloat16),
                         preferred_element_type=jnp.float32) + bwg_ref[...]
            zw_ref[...] = zw.astype(jnp.bfloat16)

        # Per-tile epilogue.  x is cast to f32 only here (per-tile live range).
        xf = x_bf.astype(jnp.float32)                          # (C, TK)
        up = jnp.dot(la_ref[...], rT_ref[...],
                     preferred_element_type=jnp.float32)       # (C, TK)
        slf = xf * (up + 1.0)                                  # x*up + x

        b_t = bscr_ref[t]                                      # (C4, TK) bf16
        y = jnp.dot(zw_ref[...], b_t,
                    preferred_element_type=jnp.float32)        # (C2, TK)
        y3 = jnp.dot(w3_ref[...], y.astype(jnp.bfloat16),
                     preferred_element_type=jnp.float32) + b3_ref[...]
        g = jnp.maximum(xf + y3, 0.0)                          # (C, TK)

        # final 1x1 conv over the channel-concat == split matmul
        out = (jnp.dot(wf1_ref[...], slf.astype(jnp.bfloat16),
                       preferred_element_type=jnp.float32)
               + jnp.dot(wf2_ref[...], g.astype(jnp.bfloat16),
                         preferred_element_type=jnp.float32)
               + bf_ref[...])
        o_ref[0] = out.astype(o_ref.dtype)


def dual_fused_pallas(x_mat, loc_mat, rT, gamma, params):
    N, C, HW = x_mat.shape
    _, _, L2p = loc_mat.shape
    tk = _pick_tile(HW)
    T = HW // tk
    C2 = params["wphi"].shape[0]
    C4 = params["wth"].shape[0]

    weights = [params[k] for k in
               ("wphi", "bphi", "wth", "bth", "wadj", "badj",
                "wwg", "bwg", "w3", "b3", "wf1", "wf2", "bf")]

    in_specs = (
        [pl.BlockSpec((1, C, tk), lambda n, p, t: (n, 0, t)),      # x tile
         pl.BlockSpec((1, C, L2p), lambda n, p, t: (n, 0, 0)),     # local feat
         # rT tiles are only needed in phase 1: index t*p parks the DMA on
         # block 0 during phase 0 (no re-fetch), streams tiles in phase 1.
         pl.BlockSpec((L2p, tk), lambda n, p, t: (0, t * p)),
         pl.BlockSpec(memory_space=pltpu.MemorySpace.SMEM)]        # gamma
        # TODO(synk): pipeline_mode=pl.Buffered(1) on these constant weights
        # (and folding the small biases into the matmuls) would save a few
        # redundant buffers / VPU passes at production sizes.
        + [pl.BlockSpec(w.shape, lambda n, p, t: (0, 0)) for w in weights])

    # Output written only in phase 1; t*p keeps the block index parked during
    # phase 0 so no garbage writeback ever reaches HBM.
    out_spec = pl.BlockSpec((1, C, tk), lambda n, p, t: (n, 0, t * p))

    scratch = [
        pltpu.VMEM((C2, C4), jnp.float32),      # z_idt accumulator
        pltpu.VMEM((T, C4, tk), jnp.bfloat16),  # staged theta-branch b tiles
        pltpu.VMEM((C2, C4), jnp.bfloat16),     # zw (post adj/wwg)
        pltpu.VMEM((C, L2p), jnp.bfloat16),     # CAM-attended local feature
    ]

    # TODO(synk): on v7x (2 TCs), split phase 2 into its own pallas_call (or a
    # core_parallel leading axis) so the HW tiles shard across both cores; in
    # this single-call form the HW axis carries the z_idt reduction and must
    # stay "arbitrary".
    return pl.pallas_call(
        dual_fused_kernel,
        out_shape=jax.ShapeDtypeStruct((N, C, HW), jnp.bfloat16),
        grid=(N, 2, T),
        in_specs=in_specs,
        out_specs=out_spec,
        scratch_shapes=scratch,
        compiler_params=pltpu.CompilerParams(
            dimension_semantics=("parallel", "arbitrary", "arbitrary"),
            vmem_limit_bytes=_vmem_limit_bytes()),
    )(x_mat, loc_mat, rT, gamma, *weights)


# ---------------------------------------------------------------------------
# Parameter init (deterministic, synthetic), eval-mode BN folding
# ---------------------------------------------------------------------------

def bn_fold(key, ch, eps=1e-5):
    k1, k2, k3, k4 = jax.random.split(key, 4)
    gamma = jax.random.uniform(k1, (ch,), minval=0.5, maxval=1.5)
    beta = 0.1 * jax.random.normal(k2, (ch,))
    mean = 0.1 * jax.random.normal(k3, (ch,))
    var = jax.random.uniform(k4, (ch,), minval=0.5, maxval=1.5)
    scale = gamma / jnp.sqrt(var + eps)
    bias = beta - mean * scale
    return scale.astype(jnp.float32), bias.astype(jnp.float32)


def init_params(key, planes, ratio=4):
    C = planes
    C4 = planes // ratio
    C2 = C4 * 2
    keys = iter(jax.random.split(key, 32))

    def conv_w(shape):
        return 0.1 * jax.random.normal(next(keys), shape, jnp.float32)

    p = {}
    # local branch: 3x depthwise 3x3 stride-2 convs + BN (stay f32, lax.conv)
    for i in range(3):
        p[f"local_w{i}"] = conv_w((C, 1, 3, 3))
        p[f"local_bn{i}"] = bn_fold(next(keys), C)
    p["cam_gamma"] = 0.1   # PyTorch inits CAM gamma to 0 (attention no-op)

    # 1x1 conv weights folded with their BN; matmul weights in bf16, biases f32.
    wphi = conv_w((C2, C)); s, b = bn_fold(next(keys), C2)
    p["wphi"], p["bphi"] = (s[:, None] * wphi).astype(jnp.bfloat16), b[:, None]
    wth = conv_w((C4, C)); s, b = bn_fold(next(keys), C4)
    p["wth"], p["bth"] = (s[:, None] * wth).astype(jnp.bfloat16), b[:, None]
    wadj = conv_w((C4, C4)); s, b = bn_fold(next(keys), C4)
    p["wadj"], p["badj"] = (s[:, None] * wadj).astype(jnp.bfloat16), b[None, :]
    wwg = conv_w((C2, C2)); s, b = bn_fold(next(keys), C2)
    p["wwg"], p["bwg"] = (s[:, None] * wwg).astype(jnp.bfloat16), b[:, None]
    w3 = conv_w((C, C2)); s, b = bn_fold(next(keys), C)
    p["w3"], p["b3"] = (s[:, None] * w3).astype(jnp.bfloat16), b[:, None]
    wf = conv_w((C, 2 * C)); s, b = bn_fold(next(keys), C)
    wf = s[:, None] * wf
    p["wf1"] = wf[:, :C].astype(jnp.bfloat16)
    p["wf2"] = wf[:, C:].astype(jnp.bfloat16)
    p["bf"] = b[:, None]
    return p


# ---------------------------------------------------------------------------
# Plain-JAX glue: local depthwise convs, bilinear interpolation matrices
# ---------------------------------------------------------------------------

def local_branch(feat, params):
    # TODO(synk): depthwise stride-2 3x3 convs kept in plain JAX (lax.conv);
    # negligible vs. the fused matmul hot path.
    C = feat.shape[1]
    loc = feat
    for i in range(3):
        loc = lax.conv_general_dilated(
            loc, params[f"local_w{i}"], window_strides=(2, 2),
            padding=((1, 1), (1, 1)),
            dimension_numbers=("NCHW", "OIHW", "NCHW"),
            feature_group_count=C)
        s, b = params[f"local_bn{i}"]
        loc = loc * s[None, :, None, None] + b[None, :, None, None]
    return loc


def interp_matrix(src, dst):
    """align_corners=True bilinear interpolation matrix of shape (dst, src)."""
    if src == 1:
        return jnp.ones((dst, 1), jnp.float32)
    if dst == 1:
        return jax.nn.one_hot(jnp.zeros((1,), jnp.int32), src,
                              dtype=jnp.float32)
    pos = jnp.arange(dst, dtype=jnp.float32) * (src - 1) / (dst - 1)
    i0 = jnp.clip(jnp.floor(pos).astype(jnp.int32), 0, src - 2)
    frac = pos - i0.astype(jnp.float32)
    return ((1.0 - frac)[:, None] * jax.nn.one_hot(i0, src, dtype=jnp.float32)
            + frac[:, None] * jax.nn.one_hot(i0 + 1, src, dtype=jnp.float32))


def dualmodule_forward(feat, params):
    N, C, H, W = feat.shape
    HW = H * W

    loc = local_branch(feat, params)
    _, _, h2, w2 = loc.shape
    L2 = h2 * w2
    L2p = max(_round_up(L2, 128), 128)   # pad K dim of CAM/upsample matmuls

    # align_corners bilinear upsample == one (L2, H*W) interpolation matrix,
    # applied inside the fused kernel (avoids materializing local_up in HBM).
    Rh = interp_matrix(h2, H)                           # (H, h2)
    Rw = interp_matrix(w2, W)                           # (W, w2)
    rT = jnp.kron(Rh, Rw).T                             # (L2, H*W)
    rT = jnp.pad(rT, ((0, L2p - L2), (0, 0))).astype(jnp.bfloat16)

    x_mat = feat.reshape(N, C, HW).astype(jnp.bfloat16)
    loc_mat = jnp.pad(loc.reshape(N, C, L2),
                      ((0, 0), (0, 0), (0, L2p - L2))).astype(jnp.float32)
    gamma = jnp.full((1,), params["cam_gamma"], jnp.float32)

    out_mat = dual_fused_pallas(x_mat, loc_mat, rT, gamma, params)
    # Output is bf16 (halves the writeback DMA); cast downstream if needed.
    return out_mat.reshape(N, C, H, W)


# ---------------------------------------------------------------------------
# Pure-JAX f32 reference (same folded params) for a correctness self-check
# ---------------------------------------------------------------------------

def dualmodule_reference(feat, params):
    N, C, H, W = feat.shape
    f32 = jnp.float32

    loc = local_branch(feat, params)
    _, _, h2, w2 = loc.shape
    lm = loc.reshape(N, C, -1)
    energy = jnp.einsum("nck,ndk->ncd", lm, lm)
    en = jnp.max(energy, -1, keepdims=True) - energy
    att = jax.nn.softmax(en, axis=-1)
    cam = params["cam_gamma"] * jnp.einsum("ncd,ndk->nck", att, lm) + lm
    cam = cam.reshape(N, C, h2, w2)
    up = jnp.einsum("Hh,nchw,Ww->ncHW",
                    interp_matrix(h2, H), cam, interp_matrix(w2, W))
    slf = feat * up + feat

    xm = feat.reshape(N, C, -1)
    wphi = params["wphi"].astype(f32); wth = params["wth"].astype(f32)
    wadj = params["wadj"].astype(f32); wwg = params["wwg"].astype(f32)
    w3 = params["w3"].astype(f32)
    wf1 = params["wf1"].astype(f32); wf2 = params["wf2"].astype(f32)
    xs = jnp.einsum("oc,ncl->nol", wphi, xm) + params["bphi"][None]
    b = jnp.einsum("oc,ncl->nol", wth, xm) + params["bth"][None]
    z_idt = jnp.einsum("ncl,ndl->ncd", xs, b)
    z = (z_idt + jnp.einsum("ncd,ed->nce", z_idt, wadj)
         + params["badj"][None])
    zw = jnp.einsum("oc,ncd->nod", wwg, z) + params["bwg"][None]
    y = jnp.einsum("ncd,ndl->ncl", zw, b)
    y3 = jnp.einsum("oc,ncl->nol", w3, y) + params["b3"][None]
    g = jnp.maximum(xm + y3, 0.0)
    out = (jnp.einsum("oc,ncl->nol", wf1, slf.reshape(N, C, -1))
           + jnp.einsum("oc,ncl->nol", wf2, g) + params["bf"][None])
    return out.reshape(N, C, H, W)


# ---------------------------------------------------------------------------

if __name__ == "__main__":
    key = jax.random.PRNGKey(0)
    k_feat, k_params = jax.random.split(key)

    # Small demo shapes; benchmark/bundle-read at production sizes
    # (e.g. C=512, H=W=64) — demo-shape timings only measure launch overhead.
    N, planes, H, W = 2, 16, 16, 16   # planes divisible by ratio=4
    feat = jax.random.normal(k_feat, (N, planes, H, W), dtype=jnp.float32)
    params = init_params(k_params, planes, ratio=4)

    out = jax.block_until_ready(dualmodule_forward(feat, params))
    assert out.shape == (N, planes, H, W)
    assert bool(jnp.all(jnp.isfinite(out)))

    # Self-check against the pure-JAX f32 reference (kernel runs bf16 matmuls
    # with f32 accumulation and emits a bf16 output).
    ref = jax.block_until_ready(dualmodule_reference(feat, params))
    scaled_err = jnp.max(jnp.abs(out.astype(jnp.float32) - ref)
                         / (jnp.abs(ref) + 1.0))
    assert bool(scaled_err < 0.1), f"max scaled error {scaled_err}"

    print("KERNEL_OK")
</pallas_src>

<mosaic_0001>
module attributes {stable_mosaic.version = 11 : i64} {
  func.func @dual_fused_kernel(%arg0: i32, %arg1: i32, %arg2: i32, %arg3: memref<1x16x128xbf16, #tpu.memory_space<vmem>>, %arg4: memref<1x16x128xf32, #tpu.memory_space<vmem>>, %arg5: memref<128x128xbf16, #tpu.memory_space<vmem>>, %arg6: memref<1xf32, #tpu.memory_space<smem>>, %arg7: memref<8x16xbf16, #tpu.memory_space<vmem>>, %arg8: memref<8x1xf32, #tpu.memory_space<vmem>>, %arg9: memref<4x16xbf16, #tpu.memory_space<vmem>>, %arg10: memref<4x1xf32, #tpu.memory_space<vmem>>, %arg11: memref<4x4xbf16, #tpu.memory_space<vmem>>, %arg12: memref<1x4xf32, #tpu.memory_space<vmem>>, %arg13: memref<8x8xbf16, #tpu.memory_space<vmem>>, %arg14: memref<8x1xf32, #tpu.memory_space<vmem>>, %arg15: memref<16x8xbf16, #tpu.memory_space<vmem>>, %arg16: memref<16x1xf32, #tpu.memory_space<vmem>>, %arg17: memref<16x16xbf16, #tpu.memory_space<vmem>>, %arg18: memref<16x16xbf16, #tpu.memory_space<vmem>>, %arg19: memref<16x1xf32, #tpu.memory_space<vmem>>, %arg20: memref<1x16x128xbf16, #tpu.memory_space<vmem>>, %arg21: memref<8x4xf32, #tpu.memory_space<vmem>>, %arg22: memref<2x4x128xbf16, #tpu.memory_space<vmem>>, %arg23: memref<8x4xbf16, #tpu.memory_space<vmem>>, %arg24: memref<16x128xbf16, #tpu.memory_space<vmem>>) attributes {dimension_semantics = [#tpu.dimension_semantics<parallel>, #tpu.dimension_semantics<arbitrary>, #tpu.dimension_semantics<arbitrary>], iteration_bounds = array<i64: 2, 2, 2>, scalar_prefetch = 0 : i64, scratch_operands = 4 : i64, tpu.core_type = #tpu.core_type<tc>, window_params = [{transform_indices = @transform_0, window_bounds = array<i64: 1, 16, 128>}, {transform_indices = @transform_1, window_bounds = array<i64: 1, 16, 128>}, {transform_indices = @transform_2, window_bounds = array<i64: 128, 128>}, {transform_indices = @transform_3, window_bounds = array<i64: 1>}, {pipeline_mode = #tpu.pipeline_mode<synchronous>, transform_indices = @transform_4, window_bounds = array<i64: 8, 16>}, {pipeline_mode = #tpu.pipeline_mode<synchronous>, transform_indices = @transform_5, window_bounds = array<i64: 8, 1>}, {pipeline_mode = #tpu.pipeline_mode<synchronous>, transform_indices = @transform_6, window_bounds = array<i64: 4, 16>}, {pipeline_mode = #tpu.pipeline_mode<synchronous>, transform_indices = @transform_7, window_bounds = array<i64: 4, 1>}, {pipeline_mode = #tpu.pipeline_mode<synchronous>, transform_indices = @transform_8, window_bounds = array<i64: 4, 4>}, {pipeline_mode = #tpu.pipeline_mode<synchronous>, transform_indices = @transform_9, window_bounds = array<i64: 1, 4>}, {pipeline_mode = #tpu.pipeline_mode<synchronous>, transform_indices = @transform_10, window_bounds = array<i64: 8, 8>}, {pipeline_mode = #tpu.pipeline_mode<synchronous>, transform_indices = @transform_11, window_bounds = array<i64: 8, 1>}, {pipeline_mode = #tpu.pipeline_mode<synchronous>, transform_indices = @transform_12, window_bounds = array<i64: 16, 8>}, {pipeline_mode = #tpu.pipeline_mode<synchronous>, transform_indices = @transform_13, window_bounds = array<i64: 16, 1>}, {pipeline_mode = #tpu.pipeline_mode<synchronous>, transform_indices = @transform_14, window_bounds = array<i64: 16, 16>}, {pipeline_mode = #tpu.pipeline_mode<synchronous>, transform_indices = @transform_15, window_bounds = array<i64: 16, 16>}, {pipeline_mode = #tpu.pipeline_mode<synchronous>, transform_indices = @transform_16, window_bounds = array<i64: 16, 1>}, {transform_indices = @transform_17, window_bounds = array<i64: 1, 16, 128>}]} {
    %c0 = arith.constant 0 : index
    %c0_0 = arith.constant 0 : index
    %c0_1 = arith.constant 0 : index
    %0 = vector.load %arg3[%c0, %c0_0, %c0_1] : memref<1x16x128xbf16, #tpu.memory_space<vmem>>, vector<1x16x128xbf16>
    %1 = vector.shape_cast %0 : vector<1x16x128xbf16> to vector<16x128xbf16>
    %c0_i32 = arith.constant 0 : i32
    %2 = arith.cmpi eq, %arg1, %c0_i32 : i32
    %3 = arith.extui %2 : i1 to i32
    %c0_i32_2 = arith.constant 0 : i32
    %4 = arith.cmpi ne, %3, %c0_i32_2 : i32
    scf.if %4 {
      %c0_i32_4 = arith.constant 0 : i32
      %8 = arith.cmpi eq, %arg2, %c0_i32_4 : i32
      %9 = arith.extui %8 : i1 to i32
      %c0_i32_5 = arith.constant 0 : i32
      %10 = arith.cmpi ne, %9, %c0_i32_5 : i32
      scf.if %10 {
        %cst_22 = arith.constant 0.000000e+00 : f32
        %31 = vector.broadcast %cst_22 : f32 to vector<8x4xf32>
        %c0_23 = arith.constant 0 : index
        %c0_24 = arith.constant 0 : index
        %32 = vector.load %arg21[%c0_23, %c0_24] : memref<8x4xf32, #tpu.memory_space<vmem>>, vector<8x4xf32>
        tpu.vector_store %arg21[%c0_23, %c0_24], %31 {strides = array<i32>} : memref<8x4xf32, #tpu.memory_space<vmem>>, vector<8x4xf32>,
      } else {
      }
      %c0_6 = arith.constant 0 : index
      %c0_7 = arith.constant 0 : index
      %11 = vector.load %arg7[%c0_6, %c0_7] : memref<8x16xbf16, #tpu.memory_space<vmem>>, vector<8x16xbf16>
      %cst = arith.constant dense<0.000000e+00> : vector<8x128xf32>
      %12 = tpu.matmul %11, %1, %cst {dimension_numbers = #tpu.dot_dimension_numbers<[1], [0], [0], [1], [0, 0, 1, 1], [], []>} : vector<8x16xbf16>, vector<16x128xbf16>, vector<8x128xf32> -> vector<8x128xf32>
      %c0_8 = arith.constant 0 : index
      %c0_9 = arith.constant 0 : index
      %13 = vector.load %arg8[%c0_8, %c0_9] : memref<8x1xf32, #tpu.memory_space<vmem>>, vector<8x1xf32>
      %14 = vector.broadcast %13 : vector<8x1xf32> to vector<8x128xf32>
      %15 = arith.addf %12, %14 : vector<8x128xf32>
      %c0_10 = arith.constant 0 : index
      %c0_11 = arith.constant 0 : index
      %16 = vector.load %arg9[%c0_10, %c0_11] : memref<4x16xbf16, #tpu.memory_space<vmem>>, vector<4x16xbf16>
      %cst_12 = arith.constant dense<0.000000e+00> : vector<4x128xf32>
      %17 = tpu.matmul %16, %1, %cst_12 {dimension_numbers = #tpu.dot_dimension_numbers<[1], [0], [0], [1], [0, 0, 1, 1], [], []>} : vector<4x16xbf16>, vector<16x128xbf16>, vector<4x128xf32> -> vector<4x128xf32>
      %c0_13 = arith.constant 0 : index
      %c0_14 = arith.constant 0 : index
      %18 = vector.load %arg10[%c0_13, %c0_14] : memref<4x1xf32, #tpu.memory_space<vmem>>, vector<4x1xf32>
      %19 = vector.broadcast %18 : vector<4x1xf32> to vector<4x128xf32>
      %20 = arith.addf %17, %19 : vector<4x128xf32>
      %21 = arith.truncf %20 : vector<4x128xf32> to vector<4x128xbf16>
      %22 = arith.index_cast %arg2 : i32 to index
      %c0_15 = arith.constant 0 : index
      %c0_16 = arith.constant 0 : index
      %23 = vector.load %arg22[%22, %c0_15, %c0_16] : memref<2x4x128xbf16, #tpu.memory_space<vmem>>, vector<1x4x128xbf16>
      %24 = vector.shape_cast %23 : vector<1x4x128xbf16> to vector<4x128xbf16>
      %25 = vector.shape_cast %21 : vector<4x128xbf16> to vector<1x4x128xbf16>
      tpu.vector_store %arg22[%22, %c0_15, %c0_16], %25 {strides = array<i32>} : memref<2x4x128xbf16, #tpu.memory_space<vmem>>, vector<1x4x128xbf16>,
      %c0_17 = arith.constant 0 : index
      %c0_18 = arith.constant 0 : index
      %26 = vector.load %arg21[%c0_17, %c0_18] : memref<8x4xf32, #tpu.memory_space<vmem>>, vector<8x4xf32>
      %27 = arith.truncf %15 : vector<8x128xf32> to vector<8x128xbf16>
      "tpu.trace_start"() <{level = 10 : i32, message = "ck,dk->cd"}> : () -> ()
      %cst_19 = arith.constant dense<0.000000e+00> : vector<8x4xf32>
      %28 = tpu.matmul %27, %21, %cst_19 {dimension_numbers = #tpu.dot_dimension_numbers<[1], [1], [0], [0], [0, 0, 1, 0], [], []>} : vector<8x128xbf16>, vector<4x128xbf16>, vector<8x4xf32> -> vector<8x4xf32>
      "tpu.trace_stop"() : () -> ()
      %29 = arith.addf %26, %28 : vector<8x4xf32>
      %c0_20 = arith.constant 0 : index
      %c0_21 = arith.constant 0 : index
      %30 = vector.load %arg21[%c0_20, %c0_21] : memref<8x4xf32, #tpu.memory_space<vmem>>, vector<8x4xf32>
      tpu.vector_store %arg21[%c0_20, %c0_21], %29 {strides = array<i32>} : memref<8x4xf32, #tpu.memory_space<vmem>>, vector<8x4xf32>,
    } else {
    }
    %c1_i32 = arith.constant 1 : i32
    %5 = arith.cmpi eq, %arg1, %c1_i32 : i32
    %6 = arith.extui %5 : i1 to i32
    %c0_i32_3 = arith.constant 0 : i32
    %7 = arith.cmpi ne, %6, %c0_i32_3 : i32
    scf.if %7 {
      %c0_i32_4 = arith.constant 0 : i32
      %8 = arith.cmpi eq, %arg2, %c0_i32_4 : i32
      %9 = arith.extui %8 : i1 to i32
      %c0_i32_5 = arith.constant 0 : i32
      %10 = arith.cmpi ne, %9, %c0_i32_5 : i32
      scf.if %10 {
        %c0_33 = arith.constant 0 : index
        %c0_34 = arith.constant 0 : index
        %c0_35 = arith.constant 0 : index
        %46 = vector.load %arg4[%c0_33, %c0_34, %c0_35] : memref<1x16x128xf32, #tpu.memory_space<vmem>>, vector<1x16x128xf32>
        %47 = vector.shape_cast %46 : vector<1x16x128xf32> to vector<16x128xf32>
        "tpu.trace_start"() <{level = 10 : i32, message = "ck,dk->cd"}> : () -> ()
        %cst_36 = arith.constant dense<0.000000e+00> : vector<16x16xf32>
        %48 = tpu.matmul %47, %47, %cst_36 {dimension_numbers = #tpu.dot_dimension_numbers<[1], [1], [0], [0], [0, 0, 1, 0], [], []>} : vector<16x128xf32>, vector<16x128xf32>, vector<16x16xf32> -> vector<16x16xf32>
        "tpu.trace_stop"() : () -> ()
        %cst_37 = arith.constant dense<0xFF800000> : vector<16xf32>
        %49 = vector.multi_reduction <maximumf>, %48, %cst_37 [1] : vector<16x16xf32> to vector<16xf32>
        %50 = vector.shape_cast %49 : vector<16xf32> to vector<16x1xf32>
        %51 = vector.broadcast %50 : vector<16x1xf32> to vector<16x16xf32>
        %52 = arith.subf %51, %48 : vector<16x16xf32>
        %cst_38 = arith.constant dense<0xFF800000> : vector<16xf32>
        %53 = vector.multi_reduction <maximumf>, %52, %cst_38 [1] : vector<16x16xf32> to vector<16xf32>
        %54 = vector.shape_cast %53 : vector<16xf32> to vector<16x1xf32>
        %55 = vector.broadcast %54 : vector<16x1xf32> to vector<16x16xf32>
        %56 = arith.subf %52, %55 : vector<16x16xf32>
        %57 = math.exp %56 : vector<16x16xf32>
        %cst_39 = arith.constant dense<0.000000e+00> : vector<16xf32>
        %58 = vector.multi_reduction <add>, %57, %cst_39 [1] : vector<16x16xf32> to vector<16xf32>
        %59 = vector.shape_cast %58 : vector<16xf32> to vector<16x1xf32>
        %60 = tpu.reciprocal %59 {approx = true} : vector<16x1xf32> -> vector<16x1xf32>
        %61 = vector.broadcast %60 : vector<16x1xf32> to vector<16x16xf32>
        %62 = arith.mulf %57, %61 : vector<16x16xf32>
        %cst_40 = arith.constant dense<0.000000e+00> : vector<16x128xf32>
        %63 = tpu.matmul %62, %47, %cst_40 {dimension_numbers = #tpu.dot_dimension_numbers<[1], [0], [0], [1], [0, 0, 1, 1], [], []>} : vector<16x16xf32>, vector<16x128xf32>, vector<16x128xf32> -> vector<16x128xf32>
        %c0_41 = arith.constant 0 : index
        %64 = memref.load %arg6[%c0_41] : memref<1xf32, #tpu.memory_space<smem>>
        %65 = vector.broadcast %64 : f32 to vector<16x128xf32>
        %66 = arith.mulf %65, %63 : vector<16x128xf32>
        %67 = arith.addf %66, %47 : vector<16x128xf32>
        %68 = arith.truncf %67 : vector<16x128xf32> to vector<16x128xbf16>
        %c0_42 = arith.constant 0 : index
        %c0_43 = arith.constant 0 : index
        %69 = vector.load %arg24[%c0_42, %c0_43] : memref<16x128xbf16, #tpu.memory_space<vmem>>, vector<16x128xbf16>
        tpu.vector_store %arg24[%c0_42, %c0_43], %68 {strides = array<i32>} : memref<16x128xbf16, #tpu.memory_space<vmem>>, vector<16x128xbf16>,
        %c0_44 = arith.constant 0 : index
        %c0_45 = arith.constant 0 : index
        %70 = vector.load %arg21[%c0_44, %c0_45] : memref<8x4xf32, #tpu.memory_space<vmem>>, vector<8x4xf32>
        %71 = arith.truncf %70 : vector<8x4xf32> to vector<8x4xbf16>
        %c0_46 = arith.constant 0 : index
        %c0_47 = arith.constant 0 : index
        %72 = vector.load %arg11[%c0_46, %c0_47] : memref<4x4xbf16, #tpu.memory_space<vmem>>, vector<4x4xbf16>
        "tpu.trace_start"() <{level = 10 : i32, message = "cd,ed->ce"}> : () -> ()
        %cst_48 = arith.constant dense<0.000000e+00> : vector<8x4xf32>
        %73 = tpu.matmul %71, %72, %cst_48 {dimension_numbers = #tpu.dot_dimension_numbers<[1], [1], [0], [0], [0, 0, 1, 0], [], []>} : vector<8x4xbf16>, vector<4x4xbf16>, vector<8x4xf32> -> vector<8x4xf32>
        "tpu.trace_stop"() : () -> ()
        %74 = arith.addf %70, %73 : vector<8x4xf32>
        %c0_49 = arith.constant 0 : index
        %c0_50 = arith.constant 0 : index
        %75 = vector.load %arg12[%c0_49, %c0_50] : memref<1x4xf32, #tpu.memory_space<vmem>>, vector<1x4xf32>
        %76 = vector.broadcast %75 : vector<1x4xf32> to vector<8x4xf32>
        %77 = arith.addf %74, %76 : vector<8x4xf32>
        %c0_51 = arith.constant 0 : index
        %c0_52 = arith.constant 0 : index
        %78 = vector.load %arg13[%c0_51, %c0_52] : memref<8x8xbf16, #tpu.memory_space<vmem>>, vector<8x8xbf16>
        %79 = arith.truncf %77 : vector<8x4xf32> to vector<8x4xbf16>
        %cst_53 = arith.constant dense<0.000000e+00> : vector<8x4xf32>
        %80 = tpu.matmul %78, %79, %cst_53 {dimension_numbers = #tpu.dot_dimension_numbers<[1], [0], [0], [1], [0, 0, 1, 1], [], []>} : vector<8x8xbf16>, vector<8x4xbf16>, vector<8x4xf32> -> vector<8x4xf32>
        %c0_54 = arith.constant 0 : index
        %c0_55 = arith.constant 0 : index
        %81 = vector.load %arg14[%c0_54, %c0_55] : memref<8x1xf32, #tpu.memory_space<vmem>>, vector<8x1xf32>
        %82 = vector.broadcast %81 : vector<8x1xf32> to vector<8x4xf32>
        %83 = arith.addf %80, %82 : vector<8x4xf32>
        %84 = arith.truncf %83 : vector<8x4xf32> to vector<8x4xbf16>
        %c0_56 = arith.constant 0 : index
        %c0_57 = arith.constant 0 : index
        %85 = vector.load %arg23[%c0_56, %c0_57] : memref<8x4xbf16, #tpu.memory_space<vmem>>, vector<8x4xbf16>
        tpu.vector_store %arg23[%c0_56, %c0_57], %84 {strides = array<i32>} : memref<8x4xbf16, #tpu.memory_space<vmem>>, vector<8x4xbf16>,
      } else {
      }
      %11 = arith.extf %1 : vector<16x128xbf16> to vector<16x128xf32>
      %c0_6 = arith.constant 0 : index
      %c0_7 = arith.constant 0 : index
      %12 = vector.load %arg24[%c0_6, %c0_7] : memref<16x128xbf16, #tpu.memory_space<vmem>>, vector<16x128xbf16>
      %c0_8 = arith.constant 0 : index
      %c0_9 = arith.constant 0 : index
      %13 = vector.load %arg5[%c0_8, %c0_9] : memref<128x128xbf16, #tpu.memory_space<vmem>>, vector<128x128xbf16>
      %cst = arith.constant dense<0.000000e+00> : vector<16x128xf32>
      %14 = tpu.matmul %12, %13, %cst {dimension_numbers = #tpu.dot_dimension_numbers<[1], [0], [0], [1], [0, 0, 1, 1], [], []>} : vector<16x128xbf16>, vector<128x128xbf16>, vector<16x128xf32> -> vector<16x128xf32>
      %cst_10 = arith.constant 1.000000e+00 : f32
      %15 = vector.broadcast %cst_10 : f32 to vector<16x128xf32>
      %16 = arith.addf %14, %15 : vector<16x128xf32>
      %17 = arith.mulf %11, %16 : vector<16x128xf32>
      %18 = arith.index_cast %arg2 : i32 to index
      %c0_11 = arith.constant 0 : index
      %c0_12 = arith.constant 0 : index
      %19 = vector.load %arg22[%18, %c0_11, %c0_12] : memref<2x4x128xbf16, #tpu.memory_space<vmem>>, vector<1x4x128xbf16>
      %20 = vector.shape_cast %19 : vector<1x4x128xbf16> to vector<4x128xbf16>
      %c0_13 = arith.constant 0 : index
      %c0_14 = arith.constant 0 : index
      %21 = vector.load %arg23[%c0_13, %c0_14] : memref<8x4xbf16, #tpu.memory_space<vmem>>, vector<8x4xbf16>
      %cst_15 = arith.constant dense<0.000000e+00> : vector<8x128xf32>
      %22 = tpu.matmul %21, %20, %cst_15 {dimension_numbers = #tpu.dot_dimension_numbers<[1], [0], [0], [1], [0, 0, 1, 1], [], []>} : vector<8x4xbf16>, vector<4x128xbf16>, vector<8x128xf32> -> vector<8x128xf32>
      %c0_16 = arith.constant 0 : index
      %c0_17 = arith.constant 0 : index
      %23 = vector.load %arg15[%c0_16, %c0_17] : memref<16x8xbf16, #tpu.memory_space<vmem>>, vector<16x8xbf16>
      %24 = arith.truncf %22 : vector<8x128xf32> to vector<8x128xbf16>
      %cst_18 = arith.constant dense<0.000000e+00> : vector<16x128xf32>
      %25 = tpu.matmul %23, %24, %cst_18 {dimension_numbers = #tpu.dot_dimension_numbers<[1], [0], [0], [1], [0, 0, 1, 1], [], []>} : vector<16x8xbf16>, vector<8x128xbf16>, vector<16x128xf32> -> vector<16x128xf32>
      %c0_19 = arith.constant 0 : index
      %c0_20 = arith.constant 0 : index
      %26 = vector.load %arg16[%c0_19, %c0_20] : memref<16x1xf32, #tpu.memory_space<vmem>>, vector<16x1xf32>
      %27 = vector.broadcast %26 : vector<16x1xf32> to vector<16x128xf32>
      %28 = arith.addf %25, %27 : vector<16x128xf32>
      %29 = arith.addf %11, %28 : vector<16x128xf32>
      %cst_21 = arith.constant 0.000000e+00 : f32
      %30 = vector.broadcast %cst_21 : f32 to vector<16x128xf32>
      %31 = arith.maximumf %29, %30 : vector<16x128xf32>
      %c0_22 = arith.constant 0 : index
      %c0_23 = arith.constant 0 : index
      %32 = vector.load %arg17[%c0_22, %c0_23] : memref<16x16xbf16, #tpu.memory_space<vmem>>, vector<16x16xbf16>
      %33 = arith.truncf %17 : vector<16x128xf32> to vector<16x128xbf16>
      %cst_24 = arith.constant dense<0.000000e+00> : vector<16x128xf32>
      %34 = tpu.matmul %32, %33, %cst_24 {dimension_numbers = #tpu.dot_dimension_numbers<[1], [0], [0], [1], [0, 0, 1, 1], [], []>} : vector<16x16xbf16>, vector<16x128xbf16>, vector<16x128xf32> -> vector<16x128xf32>
      %c0_25 = arith.constant 0 : index
      %c0_26 = arith.constant 0 : index
      %35 = vector.load %arg18[%c0_25, %c0_26] : memref<16x16xbf16, #tpu.memory_space<vmem>>, vector<16x16xbf16>
      %36 = arith.truncf %31 : vector<16x128xf32> to vector<16x128xbf16>
      %cst_27 = arith.constant dense<0.000000e+00> : vector<16x128xf32>
      %37 = tpu.matmul %35, %36, %cst_27 {dimension_numbers = #tpu.dot_dimension_numbers<[1], [0], [0], [1], [0, 0, 1, 1], [], []>} : vector<16x16xbf16>, vector<16x128xbf16>, vector<16x128xf32> -> vector<16x128xf32>
      %38 = arith.addf %34, %37 : vector<16x128xf32>
      %c0_28 = arith.constant 0 : index
      %c0_29 = arith.constant 0 : index
      %39 = vector.load %arg19[%c0_28, %c0_29] : memref<16x1xf32, #tpu.memory_space<vmem>>, vector<16x1xf32>
      %40 = vector.broadcast %39 : vector<16x1xf32> to vector<16x128xf32>
      %41 = arith.addf %38, %40 : vector<16x128xf32>
      %42 = arith.truncf %41 : vector<16x128xf32> to vector<16x128xbf16>
      %c0_30 = arith.constant 0 : index
      %c0_31 = arith.constant 0 : index
      %c0_32 = arith.constant 0 : index
      %43 = vector.load %arg20[%c0_30, %c0_31, %c0_32] : memref<1x16x128xbf16, #tpu.memory_space<vmem>>, vector<1x16x128xbf16>
      %44 = vector.shape_cast %43 : vector<1x16x128xbf16> to vector<16x128xbf16>
      %45 = vector.shape_cast %42 : vector<16x128xbf16> to vector<1x16x128xbf16>
      tpu.vector_store %arg20[%c0_30, %c0_31, %c0_32], %45 {strides = array<i32>} : memref<1x16x128xbf16, #tpu.memory_space<vmem>>, vector<1x16x128xbf16>,
    } else {
    }
    return
  }
  func.func @transform_0(%arg0: i32, %arg1: i32, %arg2: i32) -> (i32, i32, i32) {
    %c0_i32 = arith.constant 0 : i32
    %c0_i32_0 = arith.constant 0 : i32
    return %arg0, %c0_i32, %arg2 : i32, i32, i32
  }
  func.func @transform_1(%arg0: i32, %arg1: i32, %arg2: i32) -> (i32, i32, i32) {
    %c0_i32 = arith.constant 0 : i32
    %c0_i32_0 = arith.constant 0 : i32
    %c0_i32_1 = arith.constant 0 : i32
    return %arg0, %c0_i32, %c0_i32_0 : i32, i32, i32
  }
  func.func @transform_2(%arg0: i32, %arg1: i32, %arg2: i32) -> (i32, i32) {
    %0 = arith.muli %arg2, %arg1 : i32
    %c0_i32 = arith.constant 0 : i32
    %c0_i32_0 = arith.constant 0 : i32
    return %c0_i32, %0 : i32, i32
  }
  func.func @transform_3(%arg0: i32, %arg1: i32, %arg2: i32) -> i32 {
    %c0_i32 = arith.constant 0 : i32
    %c0_i32_0 = arith.constant 0 : i32
    return %c0_i32 : i32
  }
  func.func @transform_4(%arg0: i32, %arg1: i32, %arg2: i32) -> (i32, i32) {
    %c0_i32 = arith.constant 0 : i32
    %c0_i32_0 = arith.constant 0 : i32
    %c0_i32_1 = arith.constant 0 : i32
    return %c0_i32, %c0_i32_0 : i32, i32
  }
  func.func @transform_5(%arg0: i32, %arg1: i32, %arg2: i32) -> (i32, i32) {
    %c0_i32 = arith.constant 0 : i32
    %c0_i32_0 = arith.constant 0 : i32
    %c0_i32_1 = arith.constant 0 : i32
    return %c0_i32, %c0_i32_0 : i32, i32
  }
  func.func @transform_6(%arg0: i32, %arg1: i32, %arg2: i32) -> (i32, i32) {
    %c0_i32 = arith.constant 0 : i32
    %c0_i32_0 = arith.constant 0 : i32
    %c0_i32_1 = arith.constant 0 : i32
    return %c0_i32, %c0_i32_0 : i32, i32
  }
  func.func @transform_7(%arg0: i32, %arg1: i32, %arg2: i32) -> (i32, i32) {
    %c0_i32 = arith.constant 0 : i32
    %c0_i32_0 = arith.constant 0 : i32
    %c0_i32_1 = arith.constant 0 : i32
    return %c0_i32, %c0_i32_0 : i32, i32
  }
  func.func @transform_8(%arg0: i32, %arg1: i32, %arg2: i32) -> (i32, i32) {
    %c0_i32 = arith.constant 0 : i32
    %c0_i32_0 = arith.constant 0 : i32
    %c0_i32_1 = arith.constant 0 : i32
    return %c0_i32, %c0_i32_0 : i32, i32
  }
  func.func @transform_9(%arg0: i32, %arg1: i32, %arg2: i32) -> (i32, i32) {
    %c0_i32 = arith.constant 0 : i32
    %c0_i32_0 = arith.constant 0 : i32
    %c0_i32_1 = arith.constant 0 : i32
    return %c0_i32, %c0_i32_0 : i32, i32
  }
  func.func @transform_10(%arg0: i32, %arg1: i32, %arg2: i32) -> (i32, i32) {
    %c0_i32 = arith.constant 0 : i32
    %c0_i32_0 = arith.constant 0 : i32
    %c0_i32_1 = arith.constant 0 : i32
    return %c0_i32, %c0_i32_0 : i32, i32
  }
  func.func @transform_11(%arg0: i32, %arg1: i32, %arg2: i32) -> (i32, i32) {
    %c0_i32 = arith.constant 0 : i32
    %c0_i32_0 = arith.constant 0 : i32
    %c0_i32_1 = arith.constant 0 : i32
    return %c0_i32, %c0_i32_0 : i32, i32
  }
  func.func @transform_12(%arg0: i32, %arg1: i32, %arg2: i32) -> (i32, i32) {
    %c0_i32 = arith.constant 0 : i32
    %c0_i32_0 = arith.constant 0 : i32
    %c0_i32_1 = arith.constant 0 : i32
    return %c0_i32, %c0_i32_0 : i32, i32
  }
  func.func @transform_13(%arg0: i32, %arg1: i32, %arg2: i32) -> (i32, i32) {
    %c0_i32 = arith.constant 0 : i32
    %c0_i32_0 = arith.constant 0 : i32
    %c0_i32_1 = arith.constant 0 : i32
    return %c0_i32, %c0_i32_0 : i32, i32
  }
  func.func @transform_14(%arg0: i32, %arg1: i32, %arg2: i32) -> (i32, i32) {
    %c0_i32 = arith.constant 0 : i32
    %c0_i32_0 = arith.constant 0 : i32
    %c0_i32_1 = arith.constant 0 : i32
    return %c0_i32, %c0_i32_0 : i32, i32
  }
  func.func @transform_15(%arg0: i32, %arg1: i32, %arg2: i32) -> (i32, i32) {
    %c0_i32 = arith.constant 0 : i32
    %c0_i32_0 = arith.constant 0 : i32
    %c0_i32_1 = arith.constant 0 : i32
    return %c0_i32, %c0_i32_0 : i32, i32
  }
  func.func @transform_16(%arg0: i32, %arg1: i32, %arg2: i32) -> (i32, i32) {
    %c0_i32 = arith.constant 0 : i32
    %c0_i32_0 = arith.constant 0 : i32
    %c0_i32_1 = arith.constant 0 : i32
    return %c0_i32, %c0_i32_0 : i32, i32
  }
  func.func @transform_17(%arg0: i32, %arg1: i32, %arg2: i32) -> (i32, i32, i32) {
    %0 = arith.muli %arg2, %arg1 : i32
    %c0_i32 = arith.constant 0 : i32
    %c0_i32_0 = arith.constant 0 : i32
    return %arg0, %c0_i32, %0 : i32, i32, i32
  }
}

</mosaic_0001>

<llo_original>
// kernel: tpu_custom_call.1
$region0: #{tpu_custom_call.1}
  #allocation0 [shape = 'u32[]', space=smem, size = 0x4, offset = 0x4, fixed_abs, tag = 'smem constant byte address 0x4 - core index']
  #allocation1 [shape = 'u32[72,128]{1,0:T(1,128)}', space=vmem, size = 0x9000, scoped, tag = 'internal scratch']
  #allocation2 [shape = 'f32[8,4]{1,0:T(8,128)}', space=vmem, size = 0x1000, scoped, tag = 'scratch operand']
  #allocation3 [shape = 'bf16[2,4,128]{2,1,0:T(4,128)(2,1)}', space=vmem, size = 0x800, scoped, tag = 'scratch operand']
  #allocation4 [shape = 'bf16[8,4]{1,0:T(8,128)(2,1)}', space=vmem, size = 0x800, scoped, tag = 'scratch operand']
  #allocation5 [shape = 'bf16[16,128]{1,0:T(8,128)(2,1)}', space=vmem, size = 0x1000, scoped, tag = 'scratch operand']
  #allocation6 [shape = 'f32[1]{0:T(128)S(6)}', space=smem, size = 0x200, scoped, tag = 'scoped memory for tpu_custom_call.1']
  %s0 = inlined_call_operand.vmem [shape: bf16[2,16,256], index: 0, kind: input, shape index: {}]
  %s1 = inlined_call_operand.hbm [shape: f32[2,16,128], index: 1, kind: input, shape index: {}]
  %s2 = inlined_call_operand.hbm [shape: bf16[128,256], index: 2, kind: input, shape index: {}]
  %s3 = inlined_call_operand.<no memory space> [shape: f32[1], index: 3, kind: input, shape index: {}]
  %s4 = inlined_call_operand.vmem [shape: bf16[8,16], index: 4, kind: input, shape index: {}]
  %s5 = inlined_call_operand.vmem [shape: f32[8,1], index: 5, kind: input, shape index: {}]
  %s6 = inlined_call_operand.vmem [shape: bf16[4,16], index: 6, kind: input, shape index: {}]
  %s7 = inlined_call_operand.vmem [shape: f32[4,1], index: 7, kind: input, shape index: {}]
  %s8 = inlined_call_operand.vmem [shape: bf16[4,4], index: 8, kind: input, shape index: {}]
  %s9 = inlined_call_operand.vmem [shape: f32[1,4], index: 9, kind: input, shape index: {}]
  %s10 = inlined_call_operand.vmem [shape: bf16[8,8], index: 10, kind: input, shape index: {}]
  %s11 = inlined_call_operand.vmem [shape: f32[8,1], index: 11, kind: input, shape index: {}]
  %s12 = inlined_call_operand.vmem [shape: bf16[16,8], index: 12, kind: input, shape index: {}]
  %s13 = inlined_call_operand.vmem [shape: f32[16,1], index: 13, kind: input, shape index: {}]
  %s14 = inlined_call_operand.vmem [shape: bf16[16,16], index: 14, kind: input, shape index: {}]
  %s15 = inlined_call_operand.vmem [shape: bf16[16,16], index: 15, kind: input, shape index: {}]
  %s16 = inlined_call_operand.vmem [shape: f32[16,1], index: 16, kind: input, shape index: {}]
  %s17 = inlined_call_operand.hbm [shape: bf16[2,16,256], index: 17, kind: output, shape index: {}]
  %s18 = sld [smem:[#allocation0]]
  $region166: #{tpu_custom_call.1} parent=0
    _
  %s20 = ssub.s32 1, %s18
  %s21 = scalar_select 0, %s20, %s18
  %22 = sst [smem:[#allocation6]] %s3
  $region1: #{tpu_custom_call.1} parent=0
    #allocation7 [shape = 'u8[8192]{0}', space=vmem, size = 0x2000, scoped, tag = 'input window, operand 0']
    #allocation8 [shape = 'u8[16384]{0}', space=vmem, size = 0x4000, scoped, tag = 'input window, operand 1']
    #allocation9 [shape = 's32[2]{0}', space=sflag, size = 0x8, scoped, tag = 'scoped memory for tpu_custom_call.1']
    #allocation10 [shape = 's32[2]{0}', space=sflag, size = 0x8, scoped, tag = 'scoped memory for tpu_custom_call.1']
    #allocation11 [shape = 'u8[65536]{0}', space=vmem, size = 0x10000, scoped, tag = 'input window, operand 2']
    #allocation12 [shape = 's32[2]{0}', space=sflag, size = 0x8, scoped, tag = 'scoped memory for tpu_custom_call.1']
    #allocation13 [shape = 'u8[8192]{0}', space=vmem, size = 0x2000, scoped, tag = 'output window, operand 0']
    %23 = vsyncpa [#allocation9], 0
    %s24 = scalar_lea.sflag [#allocation9], 1
    %25 = vsyncpa %s24, 0
    %26 = vsyncpa [#allocation12], 0
    %s27 = scalar_lea.sflag [#allocation12], 1
    %28 = vsyncpa %s27, 0
    %29 = vsyncpa [#allocation10], 0
    %s30 = scalar_lea.sflag [#allocation10], 1
    %31 = vsyncpa %s30, 0
    loop: start=0, step=1, limit=10
    $region2: #{tpu_custom_call.1} parent=1 // loop_pre_header
      _
    $region3: #{tpu_custom_call.1} parent=1 // loop_header
      %s33 = sphi 0, %s37
      %p34 = scmp.ge.s32.totalorder %s33, 10
      %s40 = sphi 0, %s59
      %s41 = sphi 0, %s55
      %s42 = sphi 0, %s51
      %s43 = sphi 0, %s40
      %s44 = sphi 0, %s41
      %s45 = sphi 0, %s42
      %s46 = sphi 0, %s43
      %s47 = sphi 0, %s44
      %s48 = sphi 0, %s45
      %s64 = sphi 0, %s66
      %s67 = sphi 0, %s64
      %s68 = sphi 0, %s67
      %s84 = sphi 0, %s68
      %s90 = sphi 0, %s92
      %s93 = sphi 0, %s90
      %s94 = sphi 0, %s93
      %s110 = sphi 0, %s94
      %s118 = sphi 0, %s120
      %s121 = sphi 0, %s118
      %s122 = sphi 0, %s121
      %s138 = sphi 0, %s122
      %s142 = sphi 0, %s142
      %s144 = sphi 0, %s142
      %s145 = sphi 0, %s144
      %s159 = sphi 0, %s145
      %s163 = sphi 0, %s163
      %s165 = sphi 0, %s163
      %s166 = sphi 0, %s165
      %s180 = sphi 0, %s166
      %s184 = sphi 0, %s184
      %s186 = sphi 0, %s184
      %s187 = sphi 0, %s186
      %s201 = sphi 0, %s187
      %s205 = sphi 0, %s205
      %s207 = sphi 0, %s205
      %s208 = sphi 0, %s207
      %s222 = sphi 0, %s208
      %s226 = sphi 0, %s226
      %s228 = sphi 0, %s226
      %s229 = sphi 0, %s228
      %s243 = sphi 0, %s229
      %s247 = sphi 0, %s247
      %s249 = sphi 0, %s247
      %s250 = sphi 0, %s249
      %s264 = sphi 0, %s250
      %s268 = sphi 0, %s268
      %s270 = sphi 0, %s268
      %s271 = sphi 0, %s270
      %s285 = sphi 0, %s271
      %s289 = sphi 0, %s289
      %s291 = sphi 0, %s289
      %s292 = sphi 0, %s291
      %s306 = sphi 0, %s292
      %s310 = sphi 0, %s310
      %s312 = sphi 0, %s310
      %s313 = sphi 0, %s312
      %s327 = sphi 0, %s313
      %s331 = sphi 0, %s331
      %s333 = sphi 0, %s331
      %s334 = sphi 0, %s333
      %s348 = sphi 0, %s334
      %s352 = sphi 0, %s352
      %s354 = sphi 0, %s352
      %s355 = sphi 0, %s354
      %s369 = sphi 0, %s355
      %s373 = sphi 0, %s373
      %s375 = sphi 0, %s373
      %s376 = sphi 0, %s375
      %s390 = sphi 0, %s376
      %s394 = sphi 0, %s394
      %s396 = sphi 0, %s394
      %s397 = sphi 0, %s396
      %s411 = sphi 0, %s397
      %s415 = sphi 0, %s415
      %s417 = sphi 0, %s415
      %s418 = sphi 0, %s417
      %s432 = sphi 0, %s418
      %s442 = sphi 0, %s444
      %s445 = sphi 0, %s442
      %s446 = sphi 0, %s445
      %s462 = sphi 0, %s446
    $region4: #{tpu_custom_call.1} parent=1 // loop_header_branch
      %36 = sbr.rel (%p34) target = $region8
    $region5: #{tpu_custom_call.1} parent=1 // loop_body
      %s38 = ssub.s32 %s33, 1
      %s39 = ssub.s32 %s33, 2
      %s49 = sadd.s32 1, %s42
      %p50 = scmp.ge.s32.totalorder %s49, 2
      %s51 = scalar_select %p50, 0, %s49
      %s52 = sadd.s32 1, %s41
      %s53 = scalar_select %p50, %s52, %s41
      %p54 = scmp.ge.s32.totalorder %s53, 2
      %s55 = scalar_select %p54, 0, %s53
      %s56 = sadd.s32 1, %s40
      %s57 = scalar_select %p54, %s56, %s40
      %p58 = scmp.ge.s32.totalorder %s57, 2
      %s59 = scalar_select %p58, 0, %s57
      %s60 = ssub.s32 %s40, %s59
      %s61 = ssub.s32 %s42, %s51
      %s62 = sor.u32 %s60, %s61
      %p63 = scmp.eq.s32.totalorder %s62, 0
      %s65 = sadd.s32 %s64, 1
      %s66 = scalar_select %p63, %s64, %s65
      %p69 = pneg %p63
      %p70 = scmp.eq.s32.totalorder %s33, 7
      %p71 = por %p69, %p70
      %p72 = scmp.ne.s32.totalorder %s64, %s67
      %p73 = scmp.eq.s32.totalorder %s33, 0
      %p74 = por %p72, %p73
      %p75 = scmp.ne.s32.totalorder %s64, %s67
      %p76 = scmp.eq.s32.totalorder %s38, 7
      %p77 = por %p75, %p76
      %p78 = scmp.ne.s32.totalorder %s67, %s68
      %p79 = scmp.eq.s32.totalorder %s38, 0
      %p80 = por %p78, %p79
      %p81 = scmp.ne.s32.totalorder %s67, %s68
      %p82 = scmp.eq.s32.totalorder %s39, 7
      %p83 = por %p81, %p82
      %p85 = scmp.ne.s32.totalorder %s68, %s84
      %p86 = scmp.eq.s32.totalorder %s39, 0
      %p87 = por %p85, %p86
      %s88 = ssub.s32 %s40, %s59
      %p89 = scmp.eq.s32.totalorder %s88, 0
      %s91 = sadd.s32 %s90, 1
      %s92 = scalar_select %p89, %s90, %s91
      %p95 = pneg %p89
      %p96 = scmp.eq.s32.totalorder %s33, 7
      %p97 = por %p95, %p96
      %p98 = scmp.ne.s32.totalorder %s90, %s93
      %p99 = scmp.eq.s32.totalorder %s33, 0
      %p100 = por %p98, %p99
      %p101 = scmp.ne.s32.totalorder %s90, %s93
      %p102 = scmp.eq.s32.totalorder %s38, 7
      %p103 = por %p101, %p102
      %p104 = scmp.ne.s32.totalorder %s93, %s94
      %p105 = scmp.eq.s32.totalorder %s38, 0
      %p106 = por %p104, %p105
      %p107 = scmp.ne.s32.totalorder %s93, %s94
      %p108 = scmp.eq.s32.totalorder %s39, 7
      %p109 = por %p107, %p108
      %p111 = scmp.ne.s32.totalorder %s94, %s110
      %p112 = scmp.eq.s32.totalorder %s39, 0
      %p113 = por %p111, %p112
      %s114 = smul.u32 %s42, %s41
      %s115 = smul.u32 %s51, %s55
      %s116 = ssub.s32 %s114, %s115
      %p117 = scmp.eq.s32.totalorder %s116, 0
      %s119 = sadd.s32 %s118, 1
      %s120 = scalar_select %p117, %s118, %s119
      %p123 = pneg %p117
      %p124 = scmp.eq.s32.totalorder %s33, 7
      %p125 = por %p123, %p124
      %p126 = scmp.ne.s32.totalorder %s118, %s121
      %p127 = scmp.eq.s32.totalorder %s33, 0
      %p128 = por %p126, %p127
      %p129 = scmp.ne.s32.totalorder %s118, %s121
      %p130 = scmp.eq.s32.totalorder %s38, 7
      %p131 = por %p129, %p130
      %p132 = scmp.ne.s32.totalorder %s121, %s122
      %p133 = scmp.eq.s32.totalorder %s38, 0
      %p134 = por %p132, %p133
      %p135 = scmp.ne.s32.totalorder %s121, %s122
      %p136 = scmp.eq.s32.totalorder %s39, 7
      %p137 = por %p135, %p136
      %p139 = scmp.ne.s32.totalorder %s122, %s138
      %p140 = scmp.eq.s32.totalorder %s39, 0
      %p141 = por %p139, %p140
      %s143 = sadd.s32 %s142, 1
      %p146 = scmp.eq.s32.totalorder %s33, 7
      %p147 = scmp.ne.s32.totalorder %s142, %s144
      %p148 = scmp.eq.s32.totalorder %s33, 0
      %p149 = por %p147, %p148
      %p150 = scmp.ne.s32.totalorder %s142, %s144
      %p151 = scmp.eq.s32.totalorder %s38, 7
      %p152 = por %p150, %p151
      %p153 = scmp.ne.s32.totalorder %s144, %s145
      %p154 = scmp.eq.s32.totalorder %s38, 0
      %p155 = por %p153, %p154
      %p156 = scmp.ne.s32.totalorder %s144, %s145
      %p157 = scmp.eq.s32.totalorder %s39, 7
      %p158 = por %p156, %p157
      %p160 = scmp.ne.s32.totalorder %s145, %s159
      %p161 = scmp.eq.s32.totalorder %s39, 0
      %p162 = por %p160, %p161
      %s164 = sadd.s32 %s163, 1
      %p167 = scmp.eq.s32.totalorder %s33, 7
      %p168 = scmp.ne.s32.totalorder %s163, %s165
      %p169 = scmp.eq.s32.totalorder %s33, 0
      %p170 = por %p168, %p169
      %p171 = scmp.ne.s32.totalorder %s163, %s165
      %p172 = scmp.eq.s32.totalorder %s38, 7
      %p173 = por %p171, %p172
      %p174 = scmp.ne.s32.totalorder %s165, %s166
      %p175 = scmp.eq.s32.totalorder %s38, 0
      %p176 = por %p174, %p175
      %p177 = scmp.ne.s32.totalorder %s165, %s166
      %p178 = scmp.eq.s32.totalorder %s39, 7
      %p179 = por %p177, %p178
      %p181 = scmp.ne.s32.totalorder %s166, %s180
      %p182 = scmp.eq.s32.totalorder %s39, 0
      %p183 = por %p181, %p182
      %s185 = sadd.s32 %s184, 1
      %p188 = scmp.eq.s32.totalorder %s33, 7
      %p189 = scmp.ne.s32.totalorder %s184, %s186
      %p190 = scmp.eq.s32.totalorder %s33, 0
      %p191 = por %p189, %p190
      %p192 = scmp.ne.s32.totalorder %s184, %s186
      %p193 = scmp.eq.s32.totalorder %s38, 7
      %p194 = por %p192, %p193
      %p195 = scmp.ne.s32.totalorder %s186, %s187
      %p196 = scmp.eq.s32.totalorder %s38, 0
      %p197 = por %p195, %p196
      %p198 = scmp.ne.s32.totalorder %s186, %s187
      %p199 = scmp.eq.s32.totalorder %s39, 7
      %p200 = por %p198, %p199
      %p202 = scmp.ne.s32.totalorder %s187, %s201
      %p203 = scmp.eq.s32.totalorder %s39, 0
      %p204 = por %p202, %p203
      %s206 = sadd.s32 %s205, 1
      %p209 = scmp.eq.s32.totalorder %s33, 7
      %p210 = scmp.ne.s32.totalorder %s205, %s207
      %p211 = scmp.eq.s32.totalorder %s33, 0
      %p212 = por %p210, %p211
      %p213 = scmp.ne.s32.totalorder %s205, %s207
      %p214 = scmp.eq.s32.totalorder %s38, 7
      %p215 = por %p213, %p214
      %p216 = scmp.ne.s32.totalorder %s207, %s208
      %p217 = scmp.eq.s32.totalorder %s38, 0
      %p218 = por %p216, %p217
      %p219 = scmp.ne.s32.totalorder %s207, %s208
      %p220 = scmp.eq.s32.totalorder %s39, 7
      %p221 = por %p219, %p220
      %p223 = scmp.ne.s32.totalorder %s208, %s222
      %p224 = scmp.eq.s32.totalorder %s39, 0
      %p225 = por %p223, %p224
      %s227 = sadd.s32 %s226, 1
      %p230 = scmp.eq.s32.totalorder %s33, 7
      %p231 = scmp.ne.s32.totalorder %s226, %s228
      %p232 = scmp.eq.s32.totalorder %s33, 0
      %p233 = por %p231, %p232
      %p234 = scmp.ne.s32.totalorder %s226, %s228
      %p235 = scmp.eq.s32.totalorder %s38, 7
      %p236 = por %p234, %p235
      %p237 = scmp.ne.s32.totalorder %s228, %s229
      %p238 = scmp.eq.s32.totalorder %s38, 0
      %p239 = por %p237, %p238
      %p240 = scmp.ne.s32.totalorder %s228, %s229
      %p241 = scmp.eq.s32.totalorder %s39, 7
      %p242 = por %p240, %p241
      %p244 = scmp.ne.s32.totalorder %s229, %s243
      %p245 = scmp.eq.s32.totalorder %s39, 0
      %p246 = por %p244, %p245
      %s248 = sadd.s32 %s247, 1
      %p251 = scmp.eq.s32.totalorder %s33, 7
      %p252 = scmp.ne.s32.totalorder %s247, %s249
      %p253 = scmp.eq.s32.totalorder %s33, 0
      %p254 = por %p252, %p253
      %p255 = scmp.ne.s32.totalorder %s247, %s249
      %p256 = scmp.eq.s32.totalorder %s38, 7
      %p257 = por %p255, %p256
      %p258 = scmp.ne.s32.totalorder %s249, %s250
      %p259 = scmp.eq.s32.totalorder %s38, 0
      %p260 = por %p258, %p259
      %p261 = scmp.ne.s32.totalorder %s249, %s250
      %p262 = scmp.eq.s32.totalorder %s39, 7
      %p263 = por %p261, %p262
      %p265 = scmp.ne.s32.totalorder %s250, %s264
      %p266 = scmp.eq.s32.totalorder %s39, 0
      %p267 = por %p265, %p266
      %s269 = sadd.s32 %s268, 1
      %p272 = scmp.eq.s32.totalorder %s33, 7
      %p273 = scmp.ne.s32.totalorder %s268, %s270
      %p274 = scmp.eq.s32.totalorder %s33, 0
      %p275 = por %p273, %p274
      %p276 = scmp.ne.s32.totalorder %s268, %s270
      %p277 = scmp.eq.s32.totalorder %s38, 7
      %p278 = por %p276, %p277
      %p279 = scmp.ne.s32.totalorder %s270, %s271
      %p280 = scmp.eq.s32.totalorder %s38, 0
      %p281 = por %p279, %p280
      %p282 = scmp.ne.s32.totalorder %s270, %s271
      %p283 = scmp.eq.s32.totalorder %s39, 7
      %p284 = por %p282, %p283
      %p286 = scmp.ne.s32.totalorder %s271, %s285
      %p287 = scmp.eq.s32.totalorder %s39, 0
      %p288 = por %p286, %p287
      %s290 = sadd.s32 %s289, 1
      %p293 = scmp.eq.s32.totalorder %s33, 7
      %p294 = scmp.ne.s32.totalorder %s289, %s291
      %p295 = scmp.eq.s32.totalorder %s33, 0
      %p296 = por %p294, %p295
      %p297 = scmp.ne.s32.totalorder %s289, %s291
      %p298 = scmp.eq.s32.totalorder %s38, 7
      %p299 = por %p297, %p298
      %p300 = scmp.ne.s32.totalorder %s291, %s292
      %p301 = scmp.eq.s32.totalorder %s38, 0
      %p302 = por %p300, %p301
      %p303 = scmp.ne.s32.totalorder %s291, %s292
      %p304 = scmp.eq.s32.totalorder %s39, 7
      %p305 = por %p303, %p304
      %p307 = scmp.ne.s32.totalorder %s292, %s306
      %p308 = scmp.eq.s32.totalorder %s39, 0
      %p309 = por %p307, %p308
      %s311 = sadd.s32 %s310, 1
      %p314 = scmp.eq.s32.totalorder %s33, 7
      %p315 = scmp.ne.s32.totalorder %s310, %s312
      %p316 = scmp.eq.s32.totalorder %s33, 0
      %p317 = por %p315, %p316
      %p318 = scmp.ne.s32.totalorder %s310, %s312
      %p319 = scmp.eq.s32.totalorder %s38, 7
      %p320 = por %p318, %p319
      %p321 = scmp.ne.s32.totalorder %s312, %s313
      %p322 = scmp.eq.s32.totalorder %s38, 0
      %p323 = por %p321, %p322
      %p324 = scmp.ne.s32.totalorder %s312, %s313
      %p325 = scmp.eq.s32.totalorder %s39, 7
      %p326 = por %p324, %p325
      %p328 = scmp.ne.s32.totalorder %s313, %s327
      %p329 = scmp.eq.s32.totalorder %s39, 0
      %p330 = por %p328, %p329
      %s332 = sadd.s32 %s331, 1
      %p335 = scmp.eq.s32.totalorder %s33, 7
      %p336 = scmp.ne.s32.totalorder %s331, %s333
      %p337 = scmp.eq.s32.totalorder %s33, 0
      %p338 = por %p336, %p337
      %p339 = scmp.ne.s32.totalorder %s331, %s333
      %p340 = scmp.eq.s32.totalorder %s38, 7
      %p341 = por %p339, %p340
      %p342 = scmp.ne.s32.totalorder %s333, %s334
      %p343 = scmp.eq.s32.totalorder %s38, 0
      %p344 = por %p342, %p343
      %p345 = scmp.ne.s32.totalorder %s333, %s334
      %p346 = scmp.eq.s32.totalorder %s39, 7
      %p347 = por %p345, %p346
      %p349 = scmp.ne.s32.totalorder %s334, %s348
      %p350 = scmp.eq.s32.totalorder %s39, 0
      %p351 = por %p349, %p350
      %s353 = sadd.s32 %s352, 1
      %p356 = scmp.eq.s32.totalorder %s33, 7
      %p357 = scmp.ne.s32.totalorder %s352, %s354
      %p358 = scmp.eq.s32.totalorder %s33, 0
      %p359 = por %p357, %p358
      %p360 = scmp.ne.s32.totalorder %s352, %s354
      %p361 = scmp.eq.s32.totalorder %s38, 7
      %p362 = por %p360, %p361
      %p363 = scmp.ne.s32.totalorder %s354, %s355
      %p364 = scmp.eq.s32.totalorder %s38, 0
      %p365 = por %p363, %p364
      %p366 = scmp.ne.s32.totalorder %s354, %s355
      %p367 = scmp.eq.s32.totalorder %s39, 7
      %p368 = por %p366, %p367
      %p370 = scmp.ne.s32.totalorder %s355, %s369
      %p371 = scmp.eq.s32.totalorder %s39, 0
      %p372 = por %p370, %p371
      %s374 = sadd.s32 %s373, 1
      %p377 = scmp.eq.s32.totalorder %s33, 7
      %p378 = scmp.ne.s32.totalorder %s373, %s375
      %p379 = scmp.eq.s32.totalorder %s33, 0
      %p380 = por %p378, %p379
      %p381 = scmp.ne.s32.totalorder %s373, %s375
      %p382 = scmp.eq.s32.totalorder %s38, 7
      %p383 = por %p381, %p382
      %p384 = scmp.ne.s32.totalorder %s375, %s376
      %p385 = scmp.eq.s32.totalorder %s38, 0
      %p386 = por %p384, %p385
      %p387 = scmp.ne.s32.totalorder %s375, %s376
      %p388 = scmp.eq.s32.totalorder %s39, 7
      %p389 = por %p387, %p388
      %p391 = scmp.ne.s32.totalorder %s376, %s390
      %p392 = scmp.eq.s32.totalorder %s39, 0
      %p393 = por %p391, %p392
      %s395 = sadd.s32 %s394, 1
      %p398 = scmp.eq.s32.totalorder %s33, 7
      %p399 = scmp.ne.s32.totalorder %s394, %s396
      %p400 = scmp.eq.s32.totalorder %s33, 0
      %p401 = por %p399, %p400
      %p402 = scmp.ne.s32.totalorder %s394, %s396
      %p403 = scmp.eq.s32.totalorder %s38, 7
      %p404 = por %p402, %p403
      %p405 = scmp.ne.s32.totalorder %s396, %s397
      %p406 = scmp.eq.s32.totalorder %s38, 0
      %p407 = por %p405, %p406
      %p408 = scmp.ne.s32.totalorder %s396, %s397
      %p409 = scmp.eq.s32.totalorder %s39, 7
      %p410 = por %p408, %p409
      %p412 = scmp.ne.s32.totalorder %s397, %s411
      %p413 = scmp.eq.s32.totalorder %s39, 0
      %p414 = por %p412, %p413
      %s416 = sadd.s32 %s415, 1
      %p419 = scmp.eq.s32.totalorder %s33, 7
      %p420 = scmp.ne.s32.totalorder %s415, %s417
      %p421 = scmp.eq.s32.totalorder %s33, 0
      %p422 = por %p420, %p421
      %p423 = scmp.ne.s32.totalorder %s415, %s417
      %p424 = scmp.eq.s32.totalorder %s38, 7
      %p425 = por %p423, %p424
      %p426 = scmp.ne.s32.totalorder %s417, %s418
      %p427 = scmp.eq.s32.totalorder %s38, 0
      %p428 = por %p426, %p427
      %p429 = scmp.ne.s32.totalorder %s417, %s418
      %p430 = scmp.eq.s32.totalorder %s39, 7
      %p431 = por %p429, %p430
      %p433 = scmp.ne.s32.totalorder %s418, %s432
      %p434 = scmp.eq.s32.totalorder %s39, 0
      %p435 = por %p433, %p434
      %s436 = smul.u32 %s42, %s41
      %s437 = smul.u32 %s51, %s55
      %s438 = ssub.s32 %s40, %s59
      %s439 = ssub.s32 %s436, %s437
      %s440 = sor.u32 %s438, %s439
      %p441 = scmp.eq.s32.totalorder %s440, 0
      %s443 = sadd.s32 %s442, 1
      %s444 = scalar_select %p441, %s442, %s443
      %p447 = pneg %p441
      %p448 = scmp.eq.s32.totalorder %s33, 7
      %p449 = por %p447, %p448
      %p450 = scmp.ne.s32.totalorder %s442, %s445
      %p451 = scmp.eq.s32.totalorder %s33, 0
      %p452 = por %p450, %p451
      %p453 = scmp.ne.s32.totalorder %s442, %s445
      %p454 = scmp.eq.s32.totalorder %s38, 7
      %p455 = por %p453, %p454
      %p456 = scmp.ne.s32.totalorder %s445, %s446
      %p457 = scmp.eq.s32.totalorder %s38, 0
      %p458 = por %p456, %p457
      %p459 = scmp.ne.s32.totalorder %s445, %s446
      %p460 = scmp.eq.s32.totalorder %s39, 7
      %p461 = por %p459, %p460
      %p463 = scmp.ne.s32.totalorder %s446, %s462
      %p464 = scmp.eq.s32.totalorder %s39, 0
      %p465 = por %p463, %p464
      %p466 = scmp.le.s32.totalorder 1, %s33
      %p467 = scmp.lt.s32.totalorder %s33, 9
      %p468 = pnand %p466, %p467
      %p469 = pneg %p468
      // Predicated region
      $region9: #{tpu_custom_call.1} parent=5 // pred_check
        _
      $region10: #{tpu_custom_call.1} parent=5 // pred_check_branch
        %471 = sbr.rel (%p468) target = $region12
      $region11: #{tpu_custom_call.1} parent=5 // pred_region
        %s472 = ssub.s32 %s33, 1
        // Predicated region
        $region13: #{tpu_custom_call.1} parent=11 // pred_check
          %p473 = pneg %p155
        $region14: #{tpu_custom_call.1} parent=11 // pred_check_branch
          %475 = sbr.rel (%p473) target = $region16
        $region15: #{tpu_custom_call.1} parent=11 // pred_region
          _
        $region16: #{tpu_custom_call.1} parent=11 // pred_fallthru
          _
        // Predicated region
        $region17: #{tpu_custom_call.1} parent=11 // pred_check
          %p476 = pneg %p176
        $region18: #{tpu_custom_call.1} parent=11 // pred_check_branch
          %478 = sbr.rel (%p476) target = $region20
        $region19: #{tpu_custom_call.1} parent=11 // pred_region
          _
        $region20: #{tpu_custom_call.1} parent=11 // pred_fallthru
          _
        // Predicated region
        $region21: #{tpu_custom_call.1} parent=11 // pred_check
          %p479 = pneg %p197
        $region22: #{tpu_custom_call.1} parent=11 // pred_check_branch
          %481 = sbr.rel (%p479) target = $region24
        $region23: #{tpu_custom_call.1} parent=11 // pred_region
          _
        $region24: #{tpu_custom_call.1} parent=11 // pred_fallthru
          _
        // Predicated region
        $region25: #{tpu_custom_call.1} parent=11 // pred_check
          %p482 = pneg %p218
        $region26: #{tpu_custom_call.1} parent=11 // pred_check_branch
          %484 = sbr.rel (%p482) target = $region28
        $region27: #{tpu_custom_call.1} parent=11 // pred_region
          _
        $region28: #{tpu_custom_call.1} parent=11 // pred_fallthru
          _
        // Predicated region
        $region29: #{tpu_custom_call.1} parent=11 // pred_check
          %p485 = pneg %p239
        $region30: #{tpu_custom_call.1} parent=11 // pred_check_branch
          %487 = sbr.rel (%p485) target = $region32
        $region31: #{tpu_custom_call.1} parent=11 // pred_region
          _
        $region32: #{tpu_custom_call.1} parent=11 // pred_fallthru
          _
        // Predicated region
        $region33: #{tpu_custom_call.1} parent=11 // pred_check
          %p488 = pneg %p260
        $region34: #{tpu_custom_call.1} parent=11 // pred_check_branch
          %490 = sbr.rel (%p488) target = $region36
        $region35: #{tpu_custom_call.1} parent=11 // pred_region
          _
        $region36: #{tpu_custom_call.1} parent=11 // pred_fallthru
          _
        // Predicated region
        $region37: #{tpu_custom_call.1} parent=11 // pred_check
          %p491 = pneg %p281
        $region38: #{tpu_custom_call.1} parent=11 // pred_check_branch
          %493 = sbr.rel (%p491) target = $region40
        $region39: #{tpu_custom_call.1} parent=11 // pred_region
          _
        $region40: #{tpu_custom_call.1} parent=11 // pred_fallthru
          _
        // Predicated region
        $region41: #{tpu_custom_call.1} parent=11 // pred_check
          %p494 = pneg %p302
        $region42: #{tpu_custom_call.1} parent=11 // pred_check_branch
          %496 = sbr.rel (%p494) target = $region44
        $region43: #{tpu_custom_call.1} parent=11 // pred_region
          _
        $region44: #{tpu_custom_call.1} parent=11 // pred_fallthru
          _
        // Predicated region
        $region45: #{tpu_custom_call.1} parent=11 // pred_check
          %p497 = pneg %p323
        $region46: #{tpu_custom_call.1} parent=11 // pred_check_branch
          %499 = sbr.rel (%p497) target = $region48
        $region47: #{tpu_custom_call.1} parent=11 // pred_region
          _
        $region48: #{tpu_custom_call.1} parent=11 // pred_fallthru
          _
        // Predicated region
        $region49: #{tpu_custom_call.1} parent=11 // pred_check
          %p500 = pneg %p344
        $region50: #{tpu_custom_call.1} parent=11 // pred_check_branch
          %502 = sbr.rel (%p500) target = $region52
        $region51: #{tpu_custom_call.1} parent=11 // pred_region
          _
        $region52: #{tpu_custom_call.1} parent=11 // pred_fallthru
          _
        // Predicated region
        $region53: #{tpu_custom_call.1} parent=11 // pred_check
          %p503 = pneg %p365
        $region54: #{tpu_custom_call.1} parent=11 // pred_check_branch
          %505 = sbr.rel (%p503) target = $region56
        $region55: #{tpu_custom_call.1} parent=11 // pred_region
          _
        $region56: #{tpu_custom_call.1} parent=11 // pred_fallthru
          _
        // Predicated region
        $region57: #{tpu_custom_call.1} parent=11 // pred_check
          %p506 = pneg %p386
        $region58: #{tpu_custom_call.1} parent=11 // pred_check_branch
          %508 = sbr.rel (%p506) target = $region60
        $region59: #{tpu_custom_call.1} parent=11 // pred_region
          _
        $region60: #{tpu_custom_call.1} parent=11 // pred_fallthru
          _
        // Predicated region
        $region61: #{tpu_custom_call.1} parent=11 // pred_check
          %p509 = pneg %p407
        $region62: #{tpu_custom_call.1} parent=11 // pred_check_branch
          %511 = sbr.rel (%p509) target = $region64
        $region63: #{tpu_custom_call.1} parent=11 // pred_region
          _
        $region64: #{tpu_custom_call.1} parent=11 // pred_fallthru
          _
        // Predicated region
        $region65: #{tpu_custom_call.1} parent=11 // pred_check
          %p512 = pneg %p428
        $region66: #{tpu_custom_call.1} parent=11 // pred_check_branch
          %514 = sbr.rel (%p512) target = $region68
        $region67: #{tpu_custom_call.1} parent=11 // pred_region
          _
        $region68: #{tpu_custom_call.1} parent=11 // pred_fallthru
          _
      $region12: #{tpu_custom_call.1} parent=5 // pred_fallthru
        _
      %p515 = scmp.lt.s32.totalorder %s33, 8
      // Predicated region
      $region69: #{tpu_custom_call.1} parent=5 // pred_check
        %p516 = pneg %p515
      $region70: #{tpu_custom_call.1} parent=5 // pred_check_branch
        %518 = sbr.rel (%p516) target = $region72
      $region71: #{tpu_custom_call.1} parent=5 // pred_region
        // Predicated region
        $region73: #{tpu_custom_call.1} parent=71 // pred_check
          %p519 = pneg %p74
        $region74: #{tpu_custom_call.1} parent=71 // pred_check_branch
          %521 = sbr.rel (%p519) target = $region76
        $region75: #{tpu_custom_call.1} parent=71 // pred_region
          %s522 = sand.u32 %s64, 1
          %s523 = sand.u32 %s64, 1
          %s524 = smul.addr %s523, 8
          %s525 = scalar_lea.vmem [#allocation7], %s524
          %s526 = smul.addr %s40, 4
          %s527 = sadd.s32 %s42, %s526
          %s528 = smul.addr %s527, 4
          %s529 = scalar_lea.vmem %s0, %s528
          // Predicated region
          $region77: #{tpu_custom_call.1} parent=75 // pred_check
            _
          $region78: #{tpu_custom_call.1} parent=75 // pred_check_branch
            %531 = sbr.rel (0) target = $region80
          $region79: #{tpu_custom_call.1} parent=75 // pred_region
            // Predicated region
            $region81: #{tpu_custom_call.1} parent=79 // pred_check
              _
            $region82: #{tpu_custom_call.1} parent=79 // pred_check_branch
              %533 = sbr.rel target = $region84
            $region83: #{tpu_custom_call.1} parent=79 // pred_region
              // Predicated region
              $region96: #{tpu_custom_call.1} parent=83 // pred_check
                _
              $region97: #{tpu_custom_call.1} parent=83 // pred_check_branch
                %551 = sbr.rel (0) target = $region99
              $region98: #{tpu_custom_call.1} parent=83 // pred_region
                loop: start=0, step=1, limit=1
                $region100: #{tpu_custom_call.1} parent=98 // loop_pre_header
                  _
                $region101: #{tpu_custom_call.1} parent=98 // loop_header
                  %s553 = sphi 0, %s557
                  %p554 = scmp.ge.s32.totalorder %s553, 1
                  %s558 = sphi %s529, %s529
                  %s559 = sphi %s525, %s525
                $region102: #{tpu_custom_call.1} parent=98 // loop_header_branch
                  %556 = sbr.rel (%p554) target = $region106
                $region103: #{tpu_custom_call.1} parent=98 // loop_body
                  _
                $region104: #{tpu_custom_call.1} parent=98 // loop_footer
                  %s557 = sadd.s32 1, %s553
                $region105: #{tpu_custom_call.1} parent=98 // loop_footer_branch
                  %552 = sbr.rel target = $region101
                $region106: #{tpu_custom_call.1} parent=98 // loop_exit
                  _
                %s561 = ssub.s32 16, 1
                loop: start=0, step=1, limit=1
                $region107: #{tpu_custom_call.1} parent=98 // loop_pre_header
                  _
                $region108: #{tpu_custom_call.1} parent=98 // loop_header
                  %s563 = sphi 0, %s567
                  %p564 = scmp.ge.s32.totalorder %s563, 1
                  %s568 = sphi %s529, %s529
                  %s569 = sphi %s525, %s525
                $region109: #{tpu_custom_call.1} parent=98 // loop_header_branch
                  %566 = sbr.rel (%p564) target = $region113
                $region110: #{tpu_custom_call.1} parent=98 // loop_body
                  %v570 = vld [vmem:[%s568] sm:%s561]
                  %571 = vst [vmem:[%s569] sm:%s561] %v570
                  %v572 = vld [vmem:[%s568 + $0x8] sm:%s561]
                  %573 = vst [vmem:[%s569 + $0x4] sm:%s561] %v572
                $region111: #{tpu_custom_call.1} parent=98 // loop_footer
                  %s567 = sadd.s32 1, %s563
                $region112: #{tpu_custom_call.1} parent=98 // loop_footer_branch
                  %562 = sbr.rel target = $region108
                $region113: #{tpu_custom_call.1} parent=98 // loop_exit
                  _
              $region99: #{tpu_custom_call.1} parent=83 // pred_fallthru
                _
            $region84: #{tpu_custom_call.1} parent=79 // pred_fallthru
              _
            // Predicated region
            $region85: #{tpu_custom_call.1} parent=79 // pred_check
              _
            $region86: #{tpu_custom_call.1} parent=79 // pred_check_branch
              %535 = sbr.rel (0) target = $region88
            $region87: #{tpu_custom_call.1} parent=79 // pred_region
              %s537 = ssub.s32 16, 1
              loop: start=0, step=1, limit=1
              $region89: #{tpu_custom_call.1} parent=87 // loop_pre_header
                _
              $region90: #{tpu_custom_call.1} parent=87 // loop_header
                %s539 = sphi 0, %s543
                %p540 = scmp.ge.s32.totalorder %s539, 1
                %s544 = sphi %s529, %s529
                %s545 = sphi %s525, %s525
              $region91: #{tpu_custom_call.1} parent=87 // loop_header_branch
                %542 = sbr.rel (%p540) target = $region95
              $region92: #{tpu_custom_call.1} parent=87 // loop_body
                %v546 = vld [vmem:[%s544] sm:%s537]
                %547 = vst [vmem:[%s545] sm:%s537] %v546
                %v548 = vld [vmem:[%s544 + $0x8] sm:%s537]
                %549 = vst [vmem:[%s545 + $0x4] sm:%s537] %v548
              $region93: #{tpu_custom_call.1} parent=87 // loop_footer
                %s543 = sadd.s32 1, %s539
              $region94: #{tpu_custom_call.1} parent=87 // loop_footer_branch
                %538 = sbr.rel target = $region90
              $region95: #{tpu_custom_call.1} parent=87 // loop_exit
                _
            $region88: #{tpu_custom_call.1} parent=79 // pred_fallthru
              _
          $region80: #{tpu_custom_call.1} parent=75 // pred_fallthru
            _
          %574 = vnop
        $region76: #{tpu_custom_call.1} parent=71 // pred_fallthru
          _
        // Predicated region
        $region114: #{tpu_custom_call.1} parent=71 // pred_check
          %p575 = pneg %p100
        $region115: #{tpu_custom_call.1} parent=71 // pred_check_branch
          %577 = sbr.rel (%p575) target = $region117
        $region116: #{tpu_custom_call.1} parent=71 // pred_region
          %s578 = sand.u32 %s90, 1
          %s579 = scalar_lea.sflag [#allocation9], %s578
          %s580 = sand.u32 %s90, 1
          %s581 = smul.addr %s580, 16
          %s582 = scalar_lea.vmem [#allocation8], %s581
          %584 = vsyncadd %s579, 0
          %s585 = smul.addr %s40, 2
          %s586 = smul.addr %s585, 8
          %s587 = scalar_lea.hbm %s1, %s586
          %s588 = sshll.u32 %s587, 4
          %s589 = int_to_ptr.hbm [resolvable:$true] %s588
          %s590 = sshll.u32 %s582, 4
          %s591 = int_to_ptr.vmem [resolvable:$true] %s590
          %596 = dma.hbm_to_vmem [thread:$0]  %s589, 256, %s591, %s579, 128, 128, 8
        $region117: #{tpu_custom_call.1} parent=71 // pred_fallthru
          _
        // Predicated region
        $region118: #{tpu_custom_call.1} parent=71 // pred_check
          %p597 = pneg %p128
        $region119: #{tpu_custom_call.1} parent=71 // pred_check_branch
          %599 = sbr.rel (%p597) target = $region121
        $region120: #{tpu_custom_call.1} parent=71 // pred_region
          %s600 = sand.u32 %s118, 1
          %s601 = scalar_lea.sflag [#allocation12], %s600
          %s602 = sand.u32 %s118, 1
          %s603 = smul.addr %s602, 64
          %s604 = scalar_lea.vmem [#allocation11], %s603
          %s605 = smul.u32 %s42, %s41
          %607 = vsyncadd %s601, 0
          %s608 = smul.addr %s605, 4
          %s609 = scalar_lea.hbm %s2, %s608
          %s610 = sshll.u32 %s609, 4
          %s611 = int_to_ptr.hbm [resolvable:$true] %s610
          %s612 = sshll.u32 %s604, 4
          %s613 = int_to_ptr.vmem [resolvable:$true] %s612
          %618 = dma.hbm_to_vmem [thread:$0]  %s611, 1024, %s613, %s601, 128, 64, 4
        $region121: #{tpu_custom_call.1} parent=71 // pred_fallthru
          _
      $region72: #{tpu_custom_call.1} parent=5 // pred_fallthru
        _
      %p619 = scmp.le.s32.totalorder 1, %s33
      %p620 = scmp.lt.s32.totalorder %s33, 9
      %p621 = pnand %p619, %p620
      %p622 = pneg %p621
      // Predicated region
      $region122: #{tpu_custom_call.1} parent=5 // pred_check
        _
      $region123: #{tpu_custom_call.1} parent=5 // pred_check_branch
        %624 = sbr.rel (%p621) target = $region125
      $region124: #{tpu_custom_call.1} parent=5 // pred_region
        %s625 = ssub.s32 %s33, 1
        %s626 = sand.u32 %s67, 1
        %s627 = sand.u32 %s67, 1
        %s628 = smul.addr %s627, 8
        %s629 = scalar_lea.vmem [#allocation7], %s628
        // Predicated region
        $region126: #{tpu_custom_call.1} parent=124 // pred_check
          %p630 = pneg %p80
        $region127: #{tpu_custom_call.1} parent=124 // pred_check_branch
          %632 = sbr.rel (%p630) target = $region129
        $region128: #{tpu_custom_call.1} parent=124 // pred_region
          _
        $region129: #{tpu_custom_call.1} parent=124 // pred_fallthru
          _
        %s633 = sand.u32 %s93, 1
        %s634 = scalar_lea.sflag [#allocation9], %s633
        %s635 = sand.u32 %s93, 1
        %s636 = smul.addr %s635, 16
        %s637 = scalar_lea.vmem [#allocation8], %s636
        // Predicated region
        $region130: #{tpu_custom_call.1} parent=124 // pred_check
          %p638 = pneg %p106
        $region131: #{tpu_custom_call.1} parent=124 // pred_check_branch
          %640 = sbr.rel (%p638) target = $region133
        $region132: #{tpu_custom_call.1} parent=124 // pred_region
          %642 = dma.done %s634, 256
        $region133: #{tpu_custom_call.1} parent=124 // pred_fallthru
          _
        %s643 = sand.u32 %s121, 1
        %s644 = scalar_lea.sflag [#allocation12], %s643
        %s645 = sand.u32 %s121, 1
        %s646 = smul.addr %s645, 64
        %s647 = scalar_lea.vmem [#allocation11], %s646
        // Predicated region
        $region134: #{tpu_custom_call.1} parent=124 // pred_check
          %p648 = pneg %p134
        $region135: #{tpu_custom_call.1} parent=124 // pred_check_branch
          %650 = sbr.rel (%p648) target = $region137
        $region136: #{tpu_custom_call.1} parent=124 // pred_region
          %652 = dma.done %s644, 1024
        $region137: #{tpu_custom_call.1} parent=124 // pred_fallthru
          _
        %s653 = sand.u32 %s67, 1
        %s654 = sand.u32 %s67, 1
        %s655 = smul.addr %s654, 8
        %s656 = scalar_lea.vmem [#allocation7], %s655
        %p657 = pneg %p80
        %p658 = pneg %p77
        %s659 = sand.u32 %s93, 1
        %s660 = scalar_lea.sflag [#allocation9], %s659
        %s661 = sand.u32 %s93, 1
        %s662 = smul.addr %s661, 16
        %s663 = scalar_lea.vmem [#allocation8], %s662
        %p664 = pneg %p106
        %p665 = pneg %p103
        %s666 = sand.u32 %s121, 1
        %s667 = scalar_lea.sflag [#allocation12], %s666
        %s668 = sand.u32 %s121, 1
        %s669 = smul.addr %s668, 64
        %s670 = scalar_lea.vmem [#allocation11], %s669
        %p671 = pneg %p134
        %p672 = pneg %p131
        %p673 = pneg %p155
        %p674 = pneg %p152
        %p675 = pneg %p176
        %p676 = pneg %p173
        %p677 = pneg %p197
        %p678 = pneg %p194
        %p679 = pneg %p218
        %p680 = pneg %p215
        %p681 = pneg %p239
        %p682 = pneg %p236
        %p683 = pneg %p260
        %p684 = pneg %p257
        %p685 = pneg %p281
        %p686 = pneg %p278
        %p687 = pneg %p302
        %p688 = pneg %p299
        %p689 = pneg %p323
        %p690 = pneg %p320
        %p691 = pneg %p344
        %p692 = pneg %p341
        %p693 = pneg %p365
        %p694 = pneg %p362
        %p695 = pneg %p386
        %p696 = pneg %p383
        %p697 = pneg %p407
        %p698 = pneg %p404
        %p699 = pneg %p428
        %p700 = pneg %p425
        %p701 = pneg %p458
        %p702 = pneg %p455
        %s703 = sand.u32 %s445, 1
        %s704 = scalar_lea.sflag [#allocation10], %s703
        %s705 = sand.u32 %s445, 1
        %s706 = smul.addr %s705, 8
        %s707 = scalar_lea.vmem [#allocation13], %s706
        %s708 = smul.u32 %s45, %s44
        %s709 = smul.u32 %s45, %s44
        %v711 = vld [vmem:[%s629] sm:$0xf]
        %v712 = vld [vmem:[%s629 + $0x4] sm:$0xf]
        %p713 = scmp.eq.s32.totalorder %s44, 0
        // Predicated region
        $region138: #{tpu_custom_call.1} parent=124 // pred_check
          %p714 = pneg %p713
        $region139: #{tpu_custom_call.1} parent=124 // pred_check_branch
          %716 = sbr.rel (%p714) target = $region141
        $region140: #{tpu_custom_call.1} parent=124 // pred_region
          %p717 = scmp.eq.s32.totalorder %s45, 0
          // Predicated region
          $region142: #{tpu_custom_call.1} parent=140 // pred_check
            %p718 = pneg %p717
          $region143: #{tpu_custom_call.1} parent=140 // pred_check_branch
            %720 = sbr.rel (%p718) target = $region145
          $region144: #{tpu_custom_call.1} parent=140 // pred_region
            %vm721 = vcmask 31744
            %722 = vst.msk [vmem:[#allocation2] sm:$0xff] %vm721, 0.0
          $region145: #{tpu_custom_call.1} parent=140 // pred_fallthru
            _
          %v723 = vld [vmem:[%s4] sm:$0xf]
          %v724 = vld [vmem:[%s5] sm:$0xff]
          %726 = vset.pattern.permute.xlu0 0
          %727 = vperm.xlu0 %726, %v724
          %v728 = vpop.permute.xlu0 %727
          %v732 = vunpack.c.l.b16 %v711
          %v733 = vunpack.c.l.b16 %v712
          %v734 = vpack.c.b16 %v733, %v732
          %vm736 = vcmask 130048
          %v738 = vsel %vm736, %v723, 0
          %740 = vmatpush.bf16.msra.mxu0 0
          %741 = vmatpush.bf16.msra.mxu0 0
          %742 = vmatpush.bf16.msra.mxu0 0
          %743 = vmatpush.bf16.msra.mxu0 0
          %744 = vmatpush.bf16.msra.mxu0 0
          %745 = vmatpush.bf16.msra.mxu0 0
          %746 = vmatpush.bf16.msra.mxu0 0
          %747 = vmatpush.bf16.msra.mxu0 %v734
          %748 = vmatmul.bf16.gmra.mxu0 %v738
          %v749 = vpop.f32.mrf.mxu0
          %v750 = vadd.f32 %v728, %v749
          %v751 = vpop.f32.mrf.mxu0
          %752 = vdwg.mxu0
          %v753 = vld [vmem:[%s6] sm:$0x3]
          %v754 = vld [vmem:[%s7] sm:$0xf]
          %756 = vset.pattern.permute.xlu0 0
          %757 = vperm.xlu0 %756, %v754
          %v758 = vpop.permute.xlu0 %757
          %v761 = vsel %vm736, %v753, 0
          %763 = vmatpush.bf16.msra.mxu0 0
          %764 = vmatpush.bf16.msra.mxu0 0
          %765 = vmatpush.bf16.msra.mxu0 0
          %766 = vmatpush.bf16.msra.mxu0 0
          %767 = vmatpush.bf16.msra.mxu0 0
          %768 = vmatpush.bf16.msra.mxu0 0
          %769 = vmatpush.bf16.msra.mxu0 0
          %770 = vmatpush.bf16.msra.mxu0 %v734
          %771 = vmatmul.bf16.gmra.mxu0 %v761
          %v772 = vpop.f32.mrf.mxu0
          %v773 = vadd.f32 %v758, %v772
          %v774 = vpop.f32.mrf.mxu0
          %775 = vdwg.mxu0
          %v776 = vpack.c.bf16 %v773, %v773
          %s777 = smul.addr %s45, 2
          %s778 = scalar_lea.vmem [#allocation3], %s777
          %779 = vst [vmem:[%s778] sm:$0x3] %v776
          %v780 = vld [vmem:[#allocation2] sm:$0xff]
          %v781 = vpack.c.bf16 %v750, %v750
          %782 = vmatpush.bf16.xpose.msra.mxu0 0
          %783 = vmatpush.bf16.xpose.msra.mxu0 0
          %784 = vmatpush.bf16.xpose.msra.mxu0 0
          %785 = vmatpush.bf16.xpose.msra.mxu0 0
          %786 = vmatpush.bf16.xpose.msra.mxu0 0
          %787 = vmatpush.bf16.xpose.msra.mxu0 0
          %788 = vmatpush.bf16.xpose.msra.mxu0 0
          %789 = vmatpush.bf16.xpose.msra.mxu0 %v776
          %790 = vmatmul.bf16.gmra.mxu0 %v781
          %v791 = vpop.f32.mrf.mxu0
          %v792 = vadd.f32 0.0, %v791
          %v793 = vpop.f32.mrf.mxu0
          %794 = vdwg.mxu0
          %v795 = vadd.f32 %v780, %v792
          %vm796 = vcmask 31744
          %797 = vst.msk [vmem:[#allocation2] sm:$0xff] %vm796, %v795
        $region141: #{tpu_custom_call.1} parent=124 // pred_fallthru
          _
        %p798 = scmp.eq.s32.totalorder %s44, 1
        // Predicated region
        $region146: #{tpu_custom_call.1} parent=124 // pred_check
          %p799 = pneg %p798
        $region147: #{tpu_custom_call.1} parent=124 // pred_check_branch
          %801 = sbr.rel (%p799) target = $region149
        $region148: #{tpu_custom_call.1} parent=124 // pred_region
          %p802 = scmp.eq.s32.totalorder %s45, 0
          // Predicated region
          $region150: #{tpu_custom_call.1} parent=148 // pred_check
            %p803 = pneg %p802
          $region151: #{tpu_custom_call.1} parent=148 // pred_check_branch
            %805 = sbr.rel (%p803) target = $region153
          $region152: #{tpu_custom_call.1} parent=148 // pred_region
            %v806 = vld [vmem:[%s637] sm:$0xff]
            %v807 = vld [vmem:[%s637 + $0x8] sm:$0xff]
            %808 = vmatpush.xpose.msra.mxu0 0.0
            %809 = vmatpush.xpose.msra.mxu0 0.0
            %810 = vmatpush.xpose.msra.mxu0 0.0
            %811 = vmatpush.xpose.msra.mxu0 0.0
            %812 = vmatpush.xpose.msra.mxu0 0.0
            %813 = vmatpush.xpose.msra.mxu0 0.0
            %814 = vmatpush.xpose.msra.mxu0 0.0
            %815 = vmatpush.xpose.msra.mxu0 0.0
            %816 = vmatpush.xpose.msra.mxu0 0.0
            %817 = vmatpush.xpose.msra.mxu0 0.0
            %818 = vmatpush.xpose.msra.mxu0 0.0
            %819 = vmatpush.xpose.msra.mxu0 0.0
            %820 = vmatpush.xpose.msra.mxu0 0.0
            %821 = vmatpush.xpose.msra.mxu0 0.0
            %822 = vmatpush.xpose.msra.mxu0 %v807
            %823 = vmatpush.xpose.msra.mxu0 %v806
            %824 = vmatmul.f32.gmra.mxu0 %v806
            %v825 = vpop.f32.mrf.mxu0
            %v826 = vadd.f32 0.0, %v825
            %827 = vmatmul.f32.gmra.mxu0 %v807
            %v828 = vpop.f32.mrf.mxu0
            %v829 = vadd.f32 0.0, %v828
            %830 = vdwg.mxu0
            %vm831 = vcmask 130048
            %v832 = vsel %vm831, %v826, -inf
            %833 = vmax.xlane.f32.xlu0 %v832
            %v834 = vpop.xlane.xlu0 %833
            %v835 = vsel %vm831, %v829, -inf
            %836 = vmax.xlane.f32.xlu0 %v835
            %v837 = vpop.xlane.xlu0 %836
            %v838 = vsub.f32 %v834, %v826
            %v839 = vsub.f32 %v837, %v829
            %v840 = vsel %vm831, %v838, -inf
            %841 = vmax.xlane.f32.xlu0 %v840
            %v842 = vpop.xlane.xlu0 %841
            %v843 = vsel %vm831, %v839, -inf
            %844 = vmax.xlane.f32.xlu0 %v843
            %v845 = vpop.xlane.xlu0 %844
            %v846 = vsub.f32 %v838, %v842
            %v847 = vsub.f32 %v839, %v845
            %v848 = vmul.f32 %v846, 1.442695
            %v849 = vpow.pop %v848
            %v850 = vmul.f32 %v847, 1.442695
            %v851 = vpow.pop %v850
            %v852 = vsel %vm831, %v849, 0.0
            %853 = vadd.xlane.f32.xlu0 %v852
            %v854 = vpop.xlane.xlu0 %853
            %v855 = vsel %vm831, %v851, 0.0
            %856 = vadd.xlane.f32.xlu0 %v855
            %v857 = vpop.xlane.xlu0 %856
            %v858 = vrcp.pop %v854
            %v859 = vrcp.pop %v857
            %v860 = vmul.f32 %v849, %v858
            %v861 = vmul.f32 %v851, %v859
            %v863 = vsel %vm831, %v860, 0
            %v866 = vsel %vm831, %v861, 0
            %868 = vmatpush.msra.mxu0 0.0
            %869 = vmatpush.msra.mxu0 0.0
            %870 = vmatpush.msra.mxu0 0.0
            %871 = vmatpush.msra.mxu0 0.0
            %872 = vmatpush.msra.mxu0 0.0
            %873 = vmatpush.msra.mxu0 0.0
            %874 = vmatpush.msra.mxu0 0.0
            %875 = vmatpush.msra.mxu0 0.0
            %876 = vmatpush.msra.mxu0 0.0
            %877 = vmatpush.msra.mxu0 0.0
            %878 = vmatpush.msra.mxu0 0.0
            %879 = vmatpush.msra.mxu0 0.0
            %880 = vmatpush.msra.mxu0 0.0
            %881 = vmatpush.msra.mxu0 0.0
            %882 = vmatpush.msra.mxu0 %v807
            %883 = vmatpush.msra.mxu0 %v806
            %884 = vmatmul.f32.gmra.mxu0 %v863
            %v885 = vpop.f32.mrf.mxu0
            %v886 = vadd.f32 0.0, %v885
            %887 = vmatmul.f32.gmra.mxu0 %v866
            %v888 = vpop.f32.mrf.mxu0
            %v889 = vadd.f32 0.0, %v888
            %890 = vdwg.mxu0
            %s891 = sld [smem:[#allocation6]]
            %v892 = vstv %s891
            %v893 = vmul.f32 %v892, %v886
            %v894 = vmul.f32 %v892, %v889
            %v895 = vadd.f32 %v893, %v806
            %v896 = vadd.f32 %v894, %v807
            %v897 = vpack.c.bf16 %v895, %v895
            %v898 = vpack.c.bf16 %v896, %v896
            %899 = vst [vmem:[#allocation5] sm:$0xf] %v897
            %900 = vst [vmem:[#allocation5 + $0x4] sm:$0xf] %v898
            %v901 = vld [vmem:[#allocation2] sm:$0xff]
            %v902 = vpack.c.bf16 %v901, %v901
            %v903 = vld [vmem:[%s8] sm:$0x3]
            %vm904 = vcmask 31744
            %v906 = vsel %vm904, %v902, 0
            %v909 = vsel %vm904, %v903, 0
            %911 = vmatpush.bf16.xpose.msra.mxu0 0
            %912 = vmatpush.bf16.xpose.msra.mxu0 0
            %913 = vmatpush.bf16.xpose.msra.mxu0 0
            %914 = vmatpush.bf16.xpose.msra.mxu0 0
            %915 = vmatpush.bf16.xpose.msra.mxu0 0
            %916 = vmatpush.bf16.xpose.msra.mxu0 0
            %917 = vmatpush.bf16.xpose.msra.mxu0 0
            %918 = vmatpush.bf16.xpose.msra.mxu0 %v909
            %919 = vmatmul.bf16.gmra.mxu0 %v906
            %v920 = vpop.f32.mrf.mxu0
            %v921 = vadd.f32 0.0, %v920
            %v922 = vpop.f32.mrf.mxu0
            %923 = vdwg.mxu0
            %v924 = vadd.f32 %v901, %v921
            %v925 = vld [vmem:[%s9] sm:$0x1]
            %v927 = vperm.slane %v925, 0
            %v929 = vadd.f32 %v924, %v927
            %v930 = vld [vmem:[%s10] sm:$0xf]
            %v931 = vpack.c.bf16 %v929, %v929
            %v932 = vld [vmem:[%s11] sm:$0xff]
            %934 = vset.pattern.permute.xlu0 0
            %935 = vperm.xlu0 %934, %v932
            %v936 = vpop.permute.xlu0 %935
            %vm938 = vcmask 64512
            %v940 = vsel %vm938, %v930, 0
            %vm942 = vcmask 1043456
            %v944 = vsel %vm942, %v931, 0
            %946 = vmatpush.bf16.msra.mxu0 0
            %947 = vmatpush.bf16.msra.mxu0 0
            %948 = vmatpush.bf16.msra.mxu0 0
            %949 = vmatpush.bf16.msra.mxu0 0
            %950 = vmatpush.bf16.msra.mxu0 0
            %951 = vmatpush.bf16.msra.mxu0 0
            %952 = vmatpush.bf16.msra.mxu0 0
            %953 = vmatpush.bf16.msra.mxu0 %v944
            %954 = vmatmul.bf16.gmra.mxu0 %v940
            %v955 = vpop.f32.mrf.mxu0
            %v956 = vadd.f32 %v936, %v955
            %v957 = vpop.f32.mrf.mxu0
            %958 = vdwg.mxu0
            %v959 = vpack.c.bf16 %v956, %v956
            %vm960 = vcmask 27648
            %961 = vst.msk [vmem:[#allocation4] sm:$0xf] %vm960, %v959
          $region153: #{tpu_custom_call.1} parent=148 // pred_fallthru
            _
          %v962 = vunpack.c.l.bf16 %v711
          %v963 = vunpack.c.l.bf16 %v712
          %v964 = vld [vmem:[#allocation5] sm:$0xf]
          %v965 = vld [vmem:[#allocation5 + $0x4] sm:$0xf]
          %v966 = vld [vmem:[%s647] sm:$0xf]
          %v967 = vld [vmem:[%s647 + $0x4] sm:$0xf]
          %v968 = vld [vmem:[%s647 + $0x8] sm:$0xf]
          %v969 = vld [vmem:[%s647 + $0xc] sm:$0xf]
          %v970 = vld [vmem:[%s647 + $0x10] sm:$0xf]
          %v971 = vld [vmem:[%s647 + $0x14] sm:$0xf]
          %v972 = vld [vmem:[%s647 + $0x18] sm:$0xf]
          %v973 = vld [vmem:[%s647 + $0x1c] sm:$0xf]
          %v974 = vld [vmem:[%s647 + $0x20] sm:$0xf]
          %v975 = vld [vmem:[%s647 + $0x24] sm:$0xf]
          %v976 = vld [vmem:[%s647 + $0x28] sm:$0xf]
          %v977 = vld [vmem:[%s647 + $0x2c] sm:$0xf]
          %v978 = vld [vmem:[%s647 + $0x30] sm:$0xf]
          %v979 = vld [vmem:[%s647 + $0x34] sm:$0xf]
          %v980 = vld [vmem:[%s647 + $0x38] sm:$0xf]
          %v981 = vld [vmem:[%s647 + $0x3c] sm:$0xf]
          %v984 = vunpack.c.l.b16 %v964
          %v985 = vunpack.c.l.b16 %v965
          %v986 = vpack.c.b16 %v985, %v984
          %v1004 = vunpack.c.l.b16 %v966
          %v1005 = vunpack.c.l.b16 %v967
          %v1006 = vunpack.c.l.b16 %v968
          %v1007 = vunpack.c.l.b16 %v969
          %v1008 = vunpack.c.l.b16 %v970
          %v1009 = vunpack.c.l.b16 %v971
          %v1010 = vunpack.c.l.b16 %v972
          %v1011 = vunpack.c.l.b16 %v973
          %v1012 = vunpack.c.l.b16 %v974
          %v1013 = vunpack.c.l.b16 %v975
          %v1014 = vunpack.c.l.b16 %v976
          %v1015 = vunpack.c.l.b16 %v977
          %v1016 = vunpack.c.l.b16 %v978
          %v1017 = vunpack.c.l.b16 %v979
          %v1018 = vunpack.c.l.b16 %v980
          %v1019 = vunpack.c.l.b16 %v981
          %v1020 = vpack.c.b16 %v1005, %v1004
          %v1021 = vpack.c.b16 %v1007, %v1006
          %v1022 = vpack.c.b16 %v1009, %v1008
          %v1023 = vpack.c.b16 %v1011, %v1010
          %v1024 = vpack.c.b16 %v1013, %v1012
          %v1025 = vpack.c.b16 %v1015, %v1014
          %v1026 = vpack.c.b16 %v1017, %v1016
          %v1027 = vpack.c.b16 %v1019, %v1018
          %1036 = vmatpush.bf16.msra.mxu0 %v1027
          %1037 = vmatpush.bf16.msra.mxu0 %v1026
          %1038 = vmatpush.bf16.msra.mxu0 %v1025
          %1039 = vmatpush.bf16.msra.mxu0 %v1024
          %1040 = vmatpush.bf16.msra.mxu0 %v1023
          %1041 = vmatpush.bf16.msra.mxu0 %v1022
          %1042 = vmatpush.bf16.msra.mxu0 %v1021
          %1043 = vmatpush.bf16.msra.mxu0 %v1020
          %1044 = vmatmul.bf16.gmra.mxu0 %v986
          %v1045 = vpop.f32.mrf.mxu0
          %v1046 = vadd.f32 1.0, %v1045
          %v1047 = vpop.f32.mrf.mxu0
          %v1048 = vadd.f32 1.0, %v1047
          %1049 = vdwg.mxu0
          %v1050 = vmul.f32 %v962, %v1046
          %v1051 = vmul.f32 %v963, %v1048
          %s1052 = smul.addr %s45, 2
          %s1053 = scalar_lea.vmem [#allocation3], %s1052
          %v1054 = vld [vmem:[%s1053] sm:$0x3]
          %v1055 = vld [vmem:[#allocation4] sm:$0xf]
          %vm1056 = vcmask 31744
          %v1058 = vsel %vm1056, %v1055, 0
          %vm1060 = vcmask 1041408
          %v1062 = vsel %vm1060, %v1054, 0
          %1064 = vmatpush.bf16.msra.mxu0 0
          %1065 = vmatpush.bf16.msra.mxu0 0
          %1066 = vmatpush.bf16.msra.mxu0 0
          %1067 = vmatpush.bf16.msra.mxu0 0
          %1068 = vmatpush.bf16.msra.mxu0 0
          %1069 = vmatpush.bf16.msra.mxu0 0
          %1070 = vmatpush.bf16.msra.mxu0 0
          %1071 = vmatpush.bf16.msra.mxu0 %v1062
          %1072 = vmatmul.bf16.gmra.mxu0 %v1058
          %v1073 = vpop.f32.mrf.mxu0
          %v1074 = vadd.f32 0.0, %v1073
          %v1075 = vpop.f32.mrf.mxu0
          %1076 = vdwg.mxu0
          %v1077 = vld [vmem:[%s12] sm:$0xf]
          %v1078 = vld [vmem:[%s12 + $0x4] sm:$0xf]
          %v1079 = vpack.c.bf16 %v1074, %v1074
          %v1080 = vld [vmem:[%s13] sm:$0xff]
          %v1081 = vld [vmem:[%s13 + $0x8] sm:$0xff]
          %1083 = vset.pattern.permute.xlu0 0
          %1084 = vperm.xlu0 %1083, %v1080
          %v1085 = vpop.permute.xlu0 %1084
          %1088 = vset.pattern.permute.xlu0 0
          %1089 = vperm.xlu0 %1088, %v1081
          %v1090 = vpop.permute.xlu0 %1089
          %v1094 = vunpack.c.l.b16 %v1077
          %v1095 = vunpack.c.l.b16 %v1078
          %v1096 = vpack.c.b16 %v1095, %v1094
          %vm1097 = vcmask 64512
          %v1099 = vsel %vm1097, %v1096, 0
          %vm1101 = vcmask 1043456
          %v1103 = vsel %vm1101, %v1079, 0
          %1105 = vmatpush.bf16.msra.mxu0 0
          %1106 = vmatpush.bf16.msra.mxu0 0
          %1107 = vmatpush.bf16.msra.mxu0 0
          %1108 = vmatpush.bf16.msra.mxu0 0
          %1109 = vmatpush.bf16.msra.mxu0 0
          %1110 = vmatpush.bf16.msra.mxu0 0
          %1111 = vmatpush.bf16.msra.mxu0 0
          %1112 = vmatpush.bf16.msra.mxu0 %v1103
          %1113 = vmatmul.bf16.gmra.mxu0 %v1099
          %v1114 = vpop.f32.mrf.mxu0
          %v1115 = vadd.f32 %v1085, %v1114
          %v1116 = vpop.f32.mrf.mxu0
          %v1117 = vadd.f32 %v1090, %v1116
          %1118 = vdwg.mxu0
          %v1119 = vadd.f32 %v962, %v1115
          %v1120 = vadd.f32 %v963, %v1117
          %v1121 = vmax.f32 %v1119, 0.0
          %v1122 = vmax.f32 %v1120, 0.0
          %v1123 = vld [vmem:[%s14] sm:$0xf]
          %v1124 = vld [vmem:[%s14 + $0x4] sm:$0xf]
          %v1125 = vpack.c.bf16 %v1051, %v1050
          %v1126 = vld [vmem:[%s15] sm:$0xf]
          %v1127 = vld [vmem:[%s15 + $0x4] sm:$0xf]
          %v1128 = vpack.c.bf16 %v1122, %v1121
          %v1131 = vunpack.c.l.b16 %v1126
          %v1132 = vunpack.c.l.b16 %v1127
          %v1133 = vpack.c.b16 %v1132, %v1131
          %vm1134 = vcmask 130048
          %v1136 = vsel %vm1134, %v1133, 0
          %1138 = vmatpush.bf16.msra.mxu0 0
          %1139 = vmatpush.bf16.msra.mxu0 0
          %1140 = vmatpush.bf16.msra.mxu0 0
          %1141 = vmatpush.bf16.msra.mxu0 0
          %1142 = vmatpush.bf16.msra.mxu0 0
          %1143 = vmatpush.bf16.msra.mxu0 0
          %1144 = vmatpush.bf16.msra.mxu0 0
          %1145 = vmatpush.bf16.msra.mxu0 %v1128
          %1146 = vmatmul.bf16.gmra.mxu0 %v1136
          %v1147 = vpop.f32.mrf.mxu0
          %v1148 = vadd.f32 0.0, %v1147
          %v1149 = vpop.f32.mrf.mxu0
          %v1150 = vadd.f32 0.0, %v1149
          %1151 = vdwg.mxu0
          %v1154 = vunpack.c.l.b16 %v1123
          %v1155 = vunpack.c.l.b16 %v1124
          %v1156 = vpack.c.b16 %v1155, %v1154
          %v1158 = vsel %vm1134, %v1156, 0
          %1160 = vmatpush.bf16.msra.mxu0 0
          %1161 = vmatpush.bf16.msra.mxu0 0
          %1162 = vmatpush.bf16.msra.mxu0 0
          %1163 = vmatpush.bf16.msra.mxu0 0
          %1164 = vmatpush.bf16.msra.mxu0 0
          %1165 = vmatpush.bf16.msra.mxu0 0
          %1166 = vmatpush.bf16.msra.mxu0 0
          %1167 = vmatpush.bf16.msra.mxu0 %v1125
          %1168 = vmatmul.bf16.gmra.mxu0 %v1158
          %v1169 = vpop.f32.mrf.mxu0
          %v1170 = vadd.f32 %v1148, %v1169
          %v1171 = vpop.f32.mrf.mxu0
          %v1172 = vadd.f32 %v1150, %v1171
          %1173 = vdwg.mxu0
          %v1174 = vld [vmem:[%s16] sm:$0xff]
          %v1175 = vld [vmem:[%s16 + $0x8] sm:$0xff]
          %1177 = vset.pattern.permute.xlu0 0
          %1178 = vperm.xlu0 %1177, %v1174
          %v1179 = vpop.permute.xlu0 %1178
          %1182 = vset.pattern.permute.xlu0 0
          %1183 = vperm.xlu0 %1182, %v1175
          %v1184 = vpop.permute.xlu0 %1183
          %v1186 = vadd.f32 %v1170, %v1179
          %v1187 = vadd.f32 %v1172, %v1184
          %v1188 = vpack.c.bf16 %v1186, %v1186
          %v1189 = vpack.c.bf16 %v1187, %v1187
          %1190 = vst [vmem:[%s707] sm:$0xf] %v1188
          %1191 = vst [vmem:[%s707 + $0x4] sm:$0xf] %v1189
        $region149: #{tpu_custom_call.1} parent=124 // pred_fallthru
          _
        %s1192 = sand.u32 %s445, 1
        %s1193 = scalar_lea.sflag [#allocation10], %s1192
        %s1194 = sand.u32 %s445, 1
        %s1195 = smul.addr %s1194, 8
        %s1196 = scalar_lea.vmem [#allocation13], %s1195
        // Predicated region
        $region154: #{tpu_custom_call.1} parent=124 // pred_check
          %p1197 = pneg %p455
        $region155: #{tpu_custom_call.1} parent=124 // pred_check_branch
          %1199 = sbr.rel (%p1197) target = $region157
        $region156: #{tpu_custom_call.1} parent=124 // pred_region
          %s1200 = smul.u32 %s45, %s44
          %1202 = vsyncadd %s1193, 0
          %s1203 = smul.addr %s43, 4
          %s1204 = sadd.s32 %s1200, %s1203
          %s1205 = smul.addr %s1204, 4
          %s1206 = scalar_lea.hbm %s17, %s1205
          %s1207 = sshll.u32 %s1196, 4
          %s1208 = int_to_ptr.vmem [resolvable:$true] %s1207
          %s1209 = sshll.u32 %s1206, 4
          %s1210 = int_to_ptr.hbm [resolvable:$true] %s1209
          %1215 = dma.vmem_to_hbm [thread:$0]  %s1208, 128, %s1210, %s1193, 64, 128, 4
        $region157: #{tpu_custom_call.1} parent=124 // pred_fallthru
          _
      $region125: #{tpu_custom_call.1} parent=5 // pred_fallthru
        _
      %p1216 = scmp.le.s32.totalorder 2, %s33
      // Predicated region
      $region158: #{tpu_custom_call.1} parent=5 // pred_check
        %p1217 = pneg %p1216
      $region159: #{tpu_custom_call.1} parent=5 // pred_check_branch
        %1219 = sbr.rel (%p1217) target = $region161
      $region160: #{tpu_custom_call.1} parent=5 // pred_region
        %s1220 = ssub.s32 %s33, 2
        // Predicated region
        $region162: #{tpu_custom_call.1} parent=160 // pred_check
          %p1221 = pneg %p461
        $region163: #{tpu_custom_call.1} parent=160 // pred_check_branch
          %1223 = sbr.rel (%p1221) target = $region165
        $region164: #{tpu_custom_call.1} parent=160 // pred_region
          %s1224 = sand.u32 %s446, 1
          %s1225 = scalar_lea.sflag [#allocation10], %s1224
          %s1226 = sand.u32 %s446, 1
          %s1227 = smul.addr %s1226, 8
          %s1228 = scalar_lea.vmem [#allocation13], %s1227
          %1230 = dma.done %s1225, 128
        $region165: #{tpu_custom_call.1} parent=160 // pred_fallthru
          _
      $region161: #{tpu_custom_call.1} parent=5 // pred_fallthru
        _
    $region6: #{tpu_custom_call.1} parent=1 // loop_footer
      %s37 = sadd.s32 1, %s33
    $region7: #{tpu_custom_call.1} parent=1 // loop_footer_branch
      %32 = sbr.rel target = $region3
    $region8: #{tpu_custom_call.1} parent=1 // loop_exit
      _
    %1231 = vsyncpa [#allocation9], 1
    %s1232 = scalar_lea.sflag [#allocation9], 1
    %1233 = vsyncpa %s1232, 1
    %1234 = vsyncpa [#allocation12], 1
    %s1235 = scalar_lea.sflag [#allocation12], 1
    %1236 = vsyncpa %s1235, 1
    %1237 = vsyncpa [#allocation10], 1
    %s1238 = scalar_lea.sflag [#allocation10], 1
    %1239 = vsyncpa %s1238, 1

</llo_original>
